<compile_context>
chip_gen: v7x
topology: tpu7x:2x2x1
jax: 0.10.0
libtpu: 0.0.40
codegen_flags: <defaults>
</compile_context>

<pallas_src>
import jax
import jax.numpy as jnp
import numpy as np
from jax.experimental import pallas as pl
from jax.experimental.pallas import tpu as pltpu

_SUBLANE = 8
_LANE = 128


def _make_encoder_kernel(seq_len: int, bp: int, h: int):
    """Builds the fused GRU + heads kernel for static (T, padded-B, H)."""
    two_h = 2 * h

    def kernel(x_ref,            # (T*Bp, D_in)
               wi_ref,           # (D_in, 3H) fused r|z|n input weights
               bi_ref,           # (1, 3H)    fused biases (r/z fully folded; n: input only)
               whrz_ref,         # (H, 2H)    fused r|z recurrent weights
               whn_ref,          # (H, H)     n-gate recurrent weight
               bhn_ref,          # (1, H)     n-gate recurrent bias
               whead_ref,        # (H, Lp)    fused mu|logsigma head weight (lane padded)
               bhead_ref,        # (1, Lp)
               out_ref,          # (T*Bp, Lp)
               gi_ref,           # (T*Bp, 3H) scratch: input projections, all steps
               hseq_ref):        # (T*Bp, H)  scratch: hidden states, all steps
        # ---- input projection for ALL timesteps, ONE matmul (off serial path) ----
        gi_ref[...] = (jnp.dot(x_ref[...], wi_ref[...],
                               preferred_element_type=jnp.float32) + bi_ref[...])

        w_h_rz = whrz_ref[...]
        w_hn = whn_ref[...]
        b_hn = bhn_ref[...]

        # ---- serial GRU recurrence over T (hidden state stays in vregs) ----
        def step(t, h_prev):
            row = pl.multiple_of(t * bp, bp)
            g = gi_ref[pl.ds(row, bp), :]                          # (bp, 3H)
            gh_rz = jnp.dot(h_prev, w_h_rz,
                            preferred_element_type=jnp.float32)    # (bp, 2H)
            h_n = jnp.dot(h_prev, w_hn,
                          preferred_element_type=jnp.float32) + b_hn
            rz = jax.nn.sigmoid(g[:, :two_h] + gh_rz)              # r|z together
            r = rz[:, :h]
            z = rz[:, h:]
            n = jnp.tanh(g[:, two_h:] + r * h_n)
            h_new = (1.0 - z) * n + z * h_prev
            hseq_ref[pl.ds(row, bp), :] = h_new
            return h_new

        h0 = jnp.zeros((bp, h), jnp.float32)
        jax.lax.fori_loop(0, seq_len, step, h0, unroll=True)

        # ---- fused mu/logsigma heads: one matmul, one lane-dense store ----
        out_ref[...] = (jnp.dot(hseq_ref[...], whead_ref[...],
                                preferred_element_type=jnp.float32)
                        + bhead_ref[...])

    return kernel


def encoder_forward(o, a, o_next, params):
    """Pallas Encoder forward.  o, o_next: (B, T, obs), a: (B, T, act)."""
    x = jnp.concatenate((o, a, o_next), axis=2).astype(jnp.float32)  # (B, T, D_in)
    B, T, D_in = x.shape

    w_ih, w_hh = params["w_ih"], params["w_hh"]          # (D_in, 3H), (H, 3H)
    b_ih, b_hh = params["b_ih"], params["b_hh"]          # (1, 3H)
    w_mu, b_mu = params["w_mu"], params["b_mu"]          # (H, L), (1, L)
    w_ls, b_ls = params["w_ls"], params["b_ls"]
    H = w_hh.shape[0]
    L = w_mu.shape[1]

    # Fused input-side bias (gate order r|z|n): r/z recurrent biases folded in,
    # n-gate keeps only its input bias (b_hn must stay inside r * (...)).
    b_fused = jnp.concatenate(
        [b_ih[:, :2 * H] + b_hh[:, :2 * H], b_ih[:, 2 * H:]], axis=1)  # (1, 3H)
    w_h_rz = w_hh[:, :2 * H]                                           # (H, 2H)
    w_hn = w_hh[:, 2 * H:]                                             # (H, H)
    b_hn = b_hh[:, 2 * H:]                                             # (1, H)

    # Fused mu|logsigma head, zero-padded to a lane-dense 128-multiple width.
    Lp = max(_LANE, -(-2 * L // _LANE) * _LANE)
    w_head = jnp.zeros((H, Lp), jnp.float32).at[:, :2 * L].set(
        jnp.concatenate([w_mu, w_ls], axis=1))
    b_head = jnp.zeros((1, Lp), jnp.float32).at[:, :2 * L].set(
        jnp.concatenate([b_mu, b_ls], axis=1))

    # Time-major, batch padded to a full sublane group, flattened to 2-D.
    Bp = -(-B // _SUBLANE) * _SUBLANE
    x_tm = jnp.transpose(x, (1, 0, 2))                   # (T, B, D_in)
    x_tm = jnp.pad(x_tm, ((0, 0), (0, Bp - B), (0, 0)))  # (T, Bp, D_in)
    x_flat = x_tm.reshape(T * Bp, D_in)

    kernel = _make_encoder_kernel(T, Bp, H)
    inputs = (x_flat, w_ih, b_fused, w_h_rz, w_hn, b_hn, w_head, b_head)

    def full_spec(arr):
        nd = arr.ndim
        return pl.BlockSpec(arr.shape, lambda i: (0,) * nd)

    grid_spec = pltpu.PrefetchScalarGridSpec(
        num_scalar_prefetch=0,
        grid=(1,),
        in_specs=[full_spec(arr) for arr in inputs],
        out_specs=pl.BlockSpec((T * Bp, Lp), lambda i: (0, 0)),
        scratch_shapes=[pltpu.VMEM((T * Bp, 3 * H), jnp.float32),
                        pltpu.VMEM((T * Bp, H), jnp.float32)],
    )

    out = pl.pallas_call(
        kernel,
        out_shape=jax.ShapeDtypeStruct((T * Bp, Lp), jnp.float32),
        grid_spec=grid_spec,
        compiler_params=pltpu.CompilerParams(
            dimension_semantics=("arbitrary",)),
    )(*inputs)

    out = out.reshape(T, Bp, Lp)[:, :B, :2 * L]          # (T, B, 2L)
    mu = jnp.transpose(out[:, :, :L], (1, 0, 2))         # (B, T, L)
    logsigma = jnp.transpose(out[:, :, L:], (1, 0, 2))   # (B, T, L)
    return mu, logsigma


def encoder_reference(o, a, o_next, params):
    """Pure-JAX reference (PyTorch nn.GRU semantics, gate order r, z, n)."""
    x = jnp.concatenate((o, a, o_next), axis=2)
    B, T, _ = x.shape
    H = params["w_hh"].shape[0]

    def step(h, x_t):
        gi = x_t @ params["w_ih"] + params["b_ih"]
        gh = h @ params["w_hh"] + params["b_hh"]
        i_r, i_z, i_n = gi[:, :H], gi[:, H:2 * H], gi[:, 2 * H:]
        h_r, h_z, h_n = gh[:, :H], gh[:, H:2 * H], gh[:, 2 * H:]
        r = jax.nn.sigmoid(i_r + h_r)
        z = jax.nn.sigmoid(i_z + h_z)
        n = jnp.tanh(i_n + r * h_n)
        h_new = (1.0 - z) * n + z * h
        return h_new, h_new

    h0 = jnp.zeros((B, H), jnp.float32)
    _, outs = jax.lax.scan(step, h0, jnp.transpose(x, (1, 0, 2)))
    outs = jnp.transpose(outs, (1, 0, 2))                  # (B, T, H)
    mu = outs @ params["w_mu"] + params["b_mu"]
    ls = outs @ params["w_ls"] + params["b_ls"]
    return mu, ls


def init_params(key, obs_size, action_size, hidden_size, latent_size):
    d_in = obs_size * 2 + action_size
    ks = jax.random.split(key, 8)
    bound_gru = 1.0 / np.sqrt(hidden_size)
    bound_fc = 1.0 / np.sqrt(hidden_size)
    u = lambda k, shape, b: jax.random.uniform(k, shape, jnp.float32, -b, b)
    return {
        # stored transposed relative to PyTorch: (in_features, out_features)
        "w_ih": u(ks[0], (d_in, 3 * hidden_size), bound_gru),
        "w_hh": u(ks[1], (hidden_size, 3 * hidden_size), bound_gru),
        "b_ih": u(ks[2], (1, 3 * hidden_size), bound_gru),
        "b_hh": u(ks[3], (1, 3 * hidden_size), bound_gru),
        "w_mu": u(ks[4], (hidden_size, latent_size), bound_fc),
        "b_mu": u(ks[5], (1, latent_size), bound_fc),
        "w_ls": u(ks[6], (hidden_size, latent_size), bound_fc),
        "b_ls": u(ks[7], (1, latent_size), bound_fc),
    }


if __name__ == "__main__":
    obs_size, action_size, hidden_size, latent_size = 4, 2, 32, 8
    B, T = 2, 8

    key = jax.random.PRNGKey(0)
    k_p, k_o, k_a, k_on = jax.random.split(key, 4)
    params = init_params(k_p, obs_size, action_size, hidden_size, latent_size)

    o = jax.random.normal(k_o, (B, T, obs_size), jnp.float32)
    a = jax.random.normal(k_a, (B, T, action_size), jnp.float32)
    o_next = jax.random.normal(k_on, (B, T, obs_size), jnp.float32)

    mu, logsigma = jax.block_until_ready(encoder_forward(o, a, o_next, params))

    mu_ref, ls_ref = encoder_reference(o, a, o_next, params)
    np.testing.assert_allclose(np.asarray(mu), np.asarray(mu_ref), atol=1e-4, rtol=1e-4)
    np.testing.assert_allclose(np.asarray(logsigma), np.asarray(ls_ref), atol=1e-4, rtol=1e-4)

    print("KERNEL_OK")
</pallas_src>

<mosaic_0001>
module attributes {stable_mosaic.version = 11 : i64} {
  func.func @kernel(%arg0: i32, %arg1: memref<64x10xf32, #tpu.memory_space<vmem>>, %arg2: memref<10x96xf32, #tpu.memory_space<vmem>>, %arg3: memref<1x96xf32, #tpu.memory_space<vmem>>, %arg4: memref<32x64xf32, #tpu.memory_space<vmem>>, %arg5: memref<32x32xf32, #tpu.memory_space<vmem>>, %arg6: memref<1x32xf32, #tpu.memory_space<vmem>>, %arg7: memref<32x128xf32, #tpu.memory_space<vmem>>, %arg8: memref<1x128xf32, #tpu.memory_space<vmem>>, %arg9: memref<64x128xf32, #tpu.memory_space<vmem>>, %arg10: memref<64x96xf32, #tpu.memory_space<vmem>>, %arg11: memref<64x32xf32, #tpu.memory_space<vmem>>) attributes {dimension_semantics = [#tpu.dimension_semantics<arbitrary>], iteration_bounds = array<i64: 1>, scalar_prefetch = 0 : i64, scratch_operands = 2 : i64, tpu.core_type = #tpu.core_type<tc>, window_params = [{pipeline_mode = #tpu.pipeline_mode<synchronous>, transform_indices = @transform_0, window_bounds = array<i64: 64, 10>}, {pipeline_mode = #tpu.pipeline_mode<synchronous>, transform_indices = @transform_1, window_bounds = array<i64: 10, 96>}, {pipeline_mode = #tpu.pipeline_mode<synchronous>, transform_indices = @transform_2, window_bounds = array<i64: 1, 96>}, {pipeline_mode = #tpu.pipeline_mode<synchronous>, transform_indices = @transform_3, window_bounds = array<i64: 32, 64>}, {pipeline_mode = #tpu.pipeline_mode<synchronous>, transform_indices = @transform_4, window_bounds = array<i64: 32, 32>}, {pipeline_mode = #tpu.pipeline_mode<synchronous>, transform_indices = @transform_5, window_bounds = array<i64: 1, 32>}, {pipeline_mode = #tpu.pipeline_mode<synchronous>, transform_indices = @transform_6, window_bounds = array<i64: 32, 128>}, {pipeline_mode = #tpu.pipeline_mode<synchronous>, transform_indices = @transform_7, window_bounds = array<i64: 1, 128>}, {pipeline_mode = #tpu.pipeline_mode<synchronous>, transform_indices = @transform_8, window_bounds = array<i64: 64, 128>}]} {
    %c0 = arith.constant 0 : index
    %c0_0 = arith.constant 0 : index
    %0 = vector.load %arg1[%c0, %c0_0] : memref<64x10xf32, #tpu.memory_space<vmem>>, vector<64x10xf32>
    %c0_1 = arith.constant 0 : index
    %c0_2 = arith.constant 0 : index
    %1 = vector.load %arg2[%c0_1, %c0_2] : memref<10x96xf32, #tpu.memory_space<vmem>>, vector<10x96xf32>
    %cst = arith.constant dense<0.000000e+00> : vector<64x96xf32>
    %2 = tpu.matmul %0, %1, %cst {dimension_numbers = #tpu.dot_dimension_numbers<[1], [0], [0], [1], [0, 0, 1, 1], [], []>} : vector<64x10xf32>, vector<10x96xf32>, vector<64x96xf32> -> vector<64x96xf32>
    %c0_3 = arith.constant 0 : index
    %c0_4 = arith.constant 0 : index
    %3 = vector.load %arg3[%c0_3, %c0_4] : memref<1x96xf32, #tpu.memory_space<vmem>>, vector<1x96xf32>
    %4 = vector.broadcast %3 : vector<1x96xf32> to vector<64x96xf32>
    %5 = arith.addf %2, %4 : vector<64x96xf32>
    %c0_5 = arith.constant 0 : index
    %c0_6 = arith.constant 0 : index
    %6 = vector.load %arg10[%c0_5, %c0_6] : memref<64x96xf32, #tpu.memory_space<vmem>>, vector<64x96xf32>
    tpu.vector_store %arg10[%c0_5, %c0_6], %5 {strides = array<i32>} : memref<64x96xf32, #tpu.memory_space<vmem>>, vector<64x96xf32>,
    %c0_7 = arith.constant 0 : index
    %c0_8 = arith.constant 0 : index
    %7 = vector.load %arg4[%c0_7, %c0_8] : memref<32x64xf32, #tpu.memory_space<vmem>>, vector<32x64xf32>
    %c0_9 = arith.constant 0 : index
    %c0_10 = arith.constant 0 : index
    %8 = vector.load %arg5[%c0_9, %c0_10] : memref<32x32xf32, #tpu.memory_space<vmem>>, vector<32x32xf32>
    %c0_11 = arith.constant 0 : index
    %c0_12 = arith.constant 0 : index
    %9 = vector.load %arg6[%c0_11, %c0_12] : memref<1x32xf32, #tpu.memory_space<vmem>>, vector<1x32xf32>
    %cst_13 = arith.constant 0.000000e+00 : f32
    %10 = vector.broadcast %cst_13 : f32 to vector<8x32xf32>
    %c0_i32 = arith.constant 0 : i32
    %c8_i32 = arith.constant 8 : i32
    %11 = arith.muli %c0_i32, %c8_i32 : i32
    %12 = tpu.assume_multiple %11, 8 : i32
    %13 = arith.index_cast %12 : i32 to index
    %c0_14 = arith.constant 0 : index
    %14 = vector.load %arg10[%13, %c0_14] : memref<64x96xf32, #tpu.memory_space<vmem>>, vector<8x96xf32>
    %cst_15 = arith.constant dense<0.000000e+00> : vector<8x64xf32>
    %15 = tpu.matmul %10, %7, %cst_15 {dimension_numbers = #tpu.dot_dimension_numbers<[1], [0], [0], [1], [0, 0, 1, 1], [], []>} : vector<8x32xf32>, vector<32x64xf32>, vector<8x64xf32> -> vector<8x64xf32>
    %cst_16 = arith.constant dense<0.000000e+00> : vector<8x32xf32>
    %16 = tpu.matmul %10, %8, %cst_16 {dimension_numbers = #tpu.dot_dimension_numbers<[1], [0], [0], [1], [0, 0, 1, 1], [], []>} : vector<8x32xf32>, vector<32x32xf32>, vector<8x32xf32> -> vector<8x32xf32>
    %17 = vector.broadcast %9 : vector<1x32xf32> to vector<8x32xf32>
    %18 = arith.addf %16, %17 : vector<8x32xf32>
    %19 = vector.extract_strided_slice %14 {offsets = [0, 0], sizes = [8, 64], strides = [1, 1]} : vector<8x96xf32> to vector<8x64xf32>
    %20 = arith.addf %19, %15 : vector<8x64xf32>
    %21 = arith.negf %20 : vector<8x64xf32>
    %22 = math.exp %21 : vector<8x64xf32>
    %cst_17 = arith.constant 1.000000e+00 : f32
    %23 = vector.broadcast %cst_17 : f32 to vector<8x64xf32>
    %24 = arith.addf %23, %22 : vector<8x64xf32>
    %25 = arith.divf %23, %24 : vector<8x64xf32>
    %26 = vector.extract_strided_slice %25 {offsets = [0, 0], sizes = [8, 32], strides = [1, 1]} : vector<8x64xf32> to vector<8x32xf32>
    %27 = vector.extract_strided_slice %25 {offsets = [0, 32], sizes = [8, 32], strides = [1, 1]} : vector<8x64xf32> to vector<8x32xf32>
    %28 = vector.extract_strided_slice %14 {offsets = [0, 64], sizes = [8, 32], strides = [1, 1]} : vector<8x96xf32> to vector<8x32xf32>
    %29 = arith.mulf %26, %18 : vector<8x32xf32>
    %30 = arith.addf %28, %29 : vector<8x32xf32>
    %31 = math.tanh %30 : vector<8x32xf32>
    %cst_18 = arith.constant 1.000000e+00 : f32
    %32 = vector.broadcast %cst_18 : f32 to vector<8x32xf32>
    %33 = arith.subf %32, %27 : vector<8x32xf32>
    %34 = arith.mulf %33, %31 : vector<8x32xf32>
    %35 = arith.mulf %27, %10 : vector<8x32xf32>
    %36 = arith.addf %34, %35 : vector<8x32xf32>
    %37 = arith.index_cast %12 : i32 to index
    %c0_19 = arith.constant 0 : index
    %38 = vector.load %arg11[%37, %c0_19] : memref<64x32xf32, #tpu.memory_space<vmem>>, vector<8x32xf32>
    tpu.vector_store %arg11[%37, %c0_19], %36 {strides = array<i32>} : memref<64x32xf32, #tpu.memory_space<vmem>>, vector<8x32xf32>,
    %c1_i32 = arith.constant 1 : i32
    %c8_i32_20 = arith.constant 8 : i32
    %39 = arith.muli %c1_i32, %c8_i32_20 : i32
    %40 = tpu.assume_multiple %39, 8 : i32
    %41 = arith.index_cast %40 : i32 to index
    %c0_21 = arith.constant 0 : index
    %42 = vector.load %arg10[%41, %c0_21] : memref<64x96xf32, #tpu.memory_space<vmem>>, vector<8x96xf32>
    %cst_22 = arith.constant dense<0.000000e+00> : vector<8x64xf32>
    %43 = tpu.matmul %36, %7, %cst_22 {dimension_numbers = #tpu.dot_dimension_numbers<[1], [0], [0], [1], [0, 0, 1, 1], [], []>} : vector<8x32xf32>, vector<32x64xf32>, vector<8x64xf32> -> vector<8x64xf32>
    %cst_23 = arith.constant dense<0.000000e+00> : vector<8x32xf32>
    %44 = tpu.matmul %36, %8, %cst_23 {dimension_numbers = #tpu.dot_dimension_numbers<[1], [0], [0], [1], [0, 0, 1, 1], [], []>} : vector<8x32xf32>, vector<32x32xf32>, vector<8x32xf32> -> vector<8x32xf32>
    %45 = vector.broadcast %9 : vector<1x32xf32> to vector<8x32xf32>
    %46 = arith.addf %44, %45 : vector<8x32xf32>
    %47 = vector.extract_strided_slice %42 {offsets = [0, 0], sizes = [8, 64], strides = [1, 1]} : vector<8x96xf32> to vector<8x64xf32>
    %48 = arith.addf %47, %43 : vector<8x64xf32>
    %49 = arith.negf %48 : vector<8x64xf32>
    %50 = math.exp %49 : vector<8x64xf32>
    %cst_24 = arith.constant 1.000000e+00 : f32
    %51 = vector.broadcast %cst_24 : f32 to vector<8x64xf32>
    %52 = arith.addf %51, %50 : vector<8x64xf32>
    %53 = arith.divf %51, %52 : vector<8x64xf32>
    %54 = vector.extract_strided_slice %53 {offsets = [0, 0], sizes = [8, 32], strides = [1, 1]} : vector<8x64xf32> to vector<8x32xf32>
    %55 = vector.extract_strided_slice %53 {offsets = [0, 32], sizes = [8, 32], strides = [1, 1]} : vector<8x64xf32> to vector<8x32xf32>
    %56 = vector.extract_strided_slice %42 {offsets = [0, 64], sizes = [8, 32], strides = [1, 1]} : vector<8x96xf32> to vector<8x32xf32>
    %57 = arith.mulf %54, %46 : vector<8x32xf32>
    %58 = arith.addf %56, %57 : vector<8x32xf32>
    %59 = math.tanh %58 : vector<8x32xf32>
    %cst_25 = arith.constant 1.000000e+00 : f32
    %60 = vector.broadcast %cst_25 : f32 to vector<8x32xf32>
    %61 = arith.subf %60, %55 : vector<8x32xf32>
    %62 = arith.mulf %61, %59 : vector<8x32xf32>
    %63 = arith.mulf %55, %36 : vector<8x32xf32>
    %64 = arith.addf %62, %63 : vector<8x32xf32>
    %65 = arith.index_cast %40 : i32 to index
    %c0_26 = arith.constant 0 : index
    %66 = vector.load %arg11[%65, %c0_26] : memref<64x32xf32, #tpu.memory_space<vmem>>, vector<8x32xf32>
    tpu.vector_store %arg11[%65, %c0_26], %64 {strides = array<i32>} : memref<64x32xf32, #tpu.memory_space<vmem>>, vector<8x32xf32>,
    %c2_i32 = arith.constant 2 : i32
    %c8_i32_27 = arith.constant 8 : i32
    %67 = arith.muli %c2_i32, %c8_i32_27 : i32
    %68 = tpu.assume_multiple %67, 8 : i32
    %69 = arith.index_cast %68 : i32 to index
    %c0_28 = arith.constant 0 : index
    %70 = vector.load %arg10[%69, %c0_28] : memref<64x96xf32, #tpu.memory_space<vmem>>, vector<8x96xf32>
    %cst_29 = arith.constant dense<0.000000e+00> : vector<8x64xf32>
    %71 = tpu.matmul %64, %7, %cst_29 {dimension_numbers = #tpu.dot_dimension_numbers<[1], [0], [0], [1], [0, 0, 1, 1], [], []>} : vector<8x32xf32>, vector<32x64xf32>, vector<8x64xf32> -> vector<8x64xf32>
    %cst_30 = arith.constant dense<0.000000e+00> : vector<8x32xf32>
    %72 = tpu.matmul %64, %8, %cst_30 {dimension_numbers = #tpu.dot_dimension_numbers<[1], [0], [0], [1], [0, 0, 1, 1], [], []>} : vector<8x32xf32>, vector<32x32xf32>, vector<8x32xf32> -> vector<8x32xf32>
    %73 = vector.broadcast %9 : vector<1x32xf32> to vector<8x32xf32>
    %74 = arith.addf %72, %73 : vector<8x32xf32>
    %75 = vector.extract_strided_slice %70 {offsets = [0, 0], sizes = [8, 64], strides = [1, 1]} : vector<8x96xf32> to vector<8x64xf32>
    %76 = arith.addf %75, %71 : vector<8x64xf32>
    %77 = arith.negf %76 : vector<8x64xf32>
    %78 = math.exp %77 : vector<8x64xf32>
    %cst_31 = arith.constant 1.000000e+00 : f32
    %79 = vector.broadcast %cst_31 : f32 to vector<8x64xf32>
    %80 = arith.addf %79, %78 : vector<8x64xf32>
    %81 = arith.divf %79, %80 : vector<8x64xf32>
    %82 = vector.extract_strided_slice %81 {offsets = [0, 0], sizes = [8, 32], strides = [1, 1]} : vector<8x64xf32> to vector<8x32xf32>
    %83 = vector.extract_strided_slice %81 {offsets = [0, 32], sizes = [8, 32], strides = [1, 1]} : vector<8x64xf32> to vector<8x32xf32>
    %84 = vector.extract_strided_slice %70 {offsets = [0, 64], sizes = [8, 32], strides = [1, 1]} : vector<8x96xf32> to vector<8x32xf32>
    %85 = arith.mulf %82, %74 : vector<8x32xf32>
    %86 = arith.addf %84, %85 : vector<8x32xf32>
    %87 = math.tanh %86 : vector<8x32xf32>
    %cst_32 = arith.constant 1.000000e+00 : f32
    %88 = vector.broadcast %cst_32 : f32 to vector<8x32xf32>
    %89 = arith.subf %88, %83 : vector<8x32xf32>
    %90 = arith.mulf %89, %87 : vector<8x32xf32>
    %91 = arith.mulf %83, %64 : vector<8x32xf32>
    %92 = arith.addf %90, %91 : vector<8x32xf32>
    %93 = arith.index_cast %68 : i32 to index
    %c0_33 = arith.constant 0 : index
    %94 = vector.load %arg11[%93, %c0_33] : memref<64x32xf32, #tpu.memory_space<vmem>>, vector<8x32xf32>
    tpu.vector_store %arg11[%93, %c0_33], %92 {strides = array<i32>} : memref<64x32xf32, #tpu.memory_space<vmem>>, vector<8x32xf32>,
    %c3_i32 = arith.constant 3 : i32
    %c8_i32_34 = arith.constant 8 : i32
    %95 = arith.muli %c3_i32, %c8_i32_34 : i32
    %96 = tpu.assume_multiple %95, 8 : i32
    %97 = arith.index_cast %96 : i32 to index
    %c0_35 = arith.constant 0 : index
    %98 = vector.load %arg10[%97, %c0_35] : memref<64x96xf32, #tpu.memory_space<vmem>>, vector<8x96xf32>
    %cst_36 = arith.constant dense<0.000000e+00> : vector<8x64xf32>
    %99 = tpu.matmul %92, %7, %cst_36 {dimension_numbers = #tpu.dot_dimension_numbers<[1], [0], [0], [1], [0, 0, 1, 1], [], []>} : vector<8x32xf32>, vector<32x64xf32>, vector<8x64xf32> -> vector<8x64xf32>
    %cst_37 = arith.constant dense<0.000000e+00> : vector<8x32xf32>
    %100 = tpu.matmul %92, %8, %cst_37 {dimension_numbers = #tpu.dot_dimension_numbers<[1], [0], [0], [1], [0, 0, 1, 1], [], []>} : vector<8x32xf32>, vector<32x32xf32>, vector<8x32xf32> -> vector<8x32xf32>
    %101 = vector.broadcast %9 : vector<1x32xf32> to vector<8x32xf32>
    %102 = arith.addf %100, %101 : vector<8x32xf32>
    %103 = vector.extract_strided_slice %98 {offsets = [0, 0], sizes = [8, 64], strides = [1, 1]} : vector<8x96xf32> to vector<8x64xf32>
    %104 = arith.addf %103, %99 : vector<8x64xf32>
    %105 = arith.negf %104 : vector<8x64xf32>
    %106 = math.exp %105 : vector<8x64xf32>
    %cst_38 = arith.constant 1.000000e+00 : f32
    %107 = vector.broadcast %cst_38 : f32 to vector<8x64xf32>
    %108 = arith.addf %107, %106 : vector<8x64xf32>
    %109 = arith.divf %107, %108 : vector<8x64xf32>
    %110 = vector.extract_strided_slice %109 {offsets = [0, 0], sizes = [8, 32], strides = [1, 1]} : vector<8x64xf32> to vector<8x32xf32>
    %111 = vector.extract_strided_slice %109 {offsets = [0, 32], sizes = [8, 32], strides = [1, 1]} : vector<8x64xf32> to vector<8x32xf32>
    %112 = vector.extract_strided_slice %98 {offsets = [0, 64], sizes = [8, 32], strides = [1, 1]} : vector<8x96xf32> to vector<8x32xf32>
    %113 = arith.mulf %110, %102 : vector<8x32xf32>
    %114 = arith.addf %112, %113 : vector<8x32xf32>
    %115 = math.tanh %114 : vector<8x32xf32>
    %cst_39 = arith.constant 1.000000e+00 : f32
    %116 = vector.broadcast %cst_39 : f32 to vector<8x32xf32>
    %117 = arith.subf %116, %111 : vector<8x32xf32>
    %118 = arith.mulf %117, %115 : vector<8x32xf32>
    %119 = arith.mulf %111, %92 : vector<8x32xf32>
    %120 = arith.addf %118, %119 : vector<8x32xf32>
    %121 = arith.index_cast %96 : i32 to index
    %c0_40 = arith.constant 0 : index
    %122 = vector.load %arg11[%121, %c0_40] : memref<64x32xf32, #tpu.memory_space<vmem>>, vector<8x32xf32>
    tpu.vector_store %arg11[%121, %c0_40], %120 {strides = array<i32>} : memref<64x32xf32, #tpu.memory_space<vmem>>, vector<8x32xf32>,
    %c4_i32 = arith.constant 4 : i32
    %c8_i32_41 = arith.constant 8 : i32
    %123 = arith.muli %c4_i32, %c8_i32_41 : i32
    %124 = tpu.assume_multiple %123, 8 : i32
    %125 = arith.index_cast %124 : i32 to index
    %c0_42 = arith.constant 0 : index
    %126 = vector.load %arg10[%125, %c0_42] : memref<64x96xf32, #tpu.memory_space<vmem>>, vector<8x96xf32>
    %cst_43 = arith.constant dense<0.000000e+00> : vector<8x64xf32>
    %127 = tpu.matmul %120, %7, %cst_43 {dimension_numbers = #tpu.dot_dimension_numbers<[1], [0], [0], [1], [0, 0, 1, 1], [], []>} : vector<8x32xf32>, vector<32x64xf32>, vector<8x64xf32> -> vector<8x64xf32>
    %cst_44 = arith.constant dense<0.000000e+00> : vector<8x32xf32>
    %128 = tpu.matmul %120, %8, %cst_44 {dimension_numbers = #tpu.dot_dimension_numbers<[1], [0], [0], [1], [0, 0, 1, 1], [], []>} : vector<8x32xf32>, vector<32x32xf32>, vector<8x32xf32> -> vector<8x32xf32>
    %129 = vector.broadcast %9 : vector<1x32xf32> to vector<8x32xf32>
    %130 = arith.addf %128, %129 : vector<8x32xf32>
    %131 = vector.extract_strided_slice %126 {offsets = [0, 0], sizes = [8, 64], strides = [1, 1]} : vector<8x96xf32> to vector<8x64xf32>
    %132 = arith.addf %131, %127 : vector<8x64xf32>
    %133 = arith.negf %132 : vector<8x64xf32>
    %134 = math.exp %133 : vector<8x64xf32>
    %cst_45 = arith.constant 1.000000e+00 : f32
    %135 = vector.broadcast %cst_45 : f32 to vector<8x64xf32>
    %136 = arith.addf %135, %134 : vector<8x64xf32>
    %137 = arith.divf %135, %136 : vector<8x64xf32>
    %138 = vector.extract_strided_slice %137 {offsets = [0, 0], sizes = [8, 32], strides = [1, 1]} : vector<8x64xf32> to vector<8x32xf32>
    %139 = vector.extract_strided_slice %137 {offsets = [0, 32], sizes = [8, 32], strides = [1, 1]} : vector<8x64xf32> to vector<8x32xf32>
    %140 = vector.extract_strided_slice %126 {offsets = [0, 64], sizes = [8, 32], strides = [1, 1]} : vector<8x96xf32> to vector<8x32xf32>
    %141 = arith.mulf %138, %130 : vector<8x32xf32>
    %142 = arith.addf %140, %141 : vector<8x32xf32>
    %143 = math.tanh %142 : vector<8x32xf32>
    %cst_46 = arith.constant 1.000000e+00 : f32
    %144 = vector.broadcast %cst_46 : f32 to vector<8x32xf32>
    %145 = arith.subf %144, %139 : vector<8x32xf32>
    %146 = arith.mulf %145, %143 : vector<8x32xf32>
    %147 = arith.mulf %139, %120 : vector<8x32xf32>
    %148 = arith.addf %146, %147 : vector<8x32xf32>
    %149 = arith.index_cast %124 : i32 to index
    %c0_47 = arith.constant 0 : index
    %150 = vector.load %arg11[%149, %c0_47] : memref<64x32xf32, #tpu.memory_space<vmem>>, vector<8x32xf32>
    tpu.vector_store %arg11[%149, %c0_47], %148 {strides = array<i32>} : memref<64x32xf32, #tpu.memory_space<vmem>>, vector<8x32xf32>,
    %c5_i32 = arith.constant 5 : i32
    %c8_i32_48 = arith.constant 8 : i32
    %151 = arith.muli %c5_i32, %c8_i32_48 : i32
    %152 = tpu.assume_multiple %151, 8 : i32
    %153 = arith.index_cast %152 : i32 to index
    %c0_49 = arith.constant 0 : index
    %154 = vector.load %arg10[%153, %c0_49] : memref<64x96xf32, #tpu.memory_space<vmem>>, vector<8x96xf32>
    %cst_50 = arith.constant dense<0.000000e+00> : vector<8x64xf32>
    %155 = tpu.matmul %148, %7, %cst_50 {dimension_numbers = #tpu.dot_dimension_numbers<[1], [0], [0], [1], [0, 0, 1, 1], [], []>} : vector<8x32xf32>, vector<32x64xf32>, vector<8x64xf32> -> vector<8x64xf32>
    %cst_51 = arith.constant dense<0.000000e+00> : vector<8x32xf32>
    %156 = tpu.matmul %148, %8, %cst_51 {dimension_numbers = #tpu.dot_dimension_numbers<[1], [0], [0], [1], [0, 0, 1, 1], [], []>} : vector<8x32xf32>, vector<32x32xf32>, vector<8x32xf32> -> vector<8x32xf32>
    %157 = vector.broadcast %9 : vector<1x32xf32> to vector<8x32xf32>
    %158 = arith.addf %156, %157 : vector<8x32xf32>
    %159 = vector.extract_strided_slice %154 {offsets = [0, 0], sizes = [8, 64], strides = [1, 1]} : vector<8x96xf32> to vector<8x64xf32>
    %160 = arith.addf %159, %155 : vector<8x64xf32>
    %161 = arith.negf %160 : vector<8x64xf32>
    %162 = math.exp %161 : vector<8x64xf32>
    %cst_52 = arith.constant 1.000000e+00 : f32
    %163 = vector.broadcast %cst_52 : f32 to vector<8x64xf32>
    %164 = arith.addf %163, %162 : vector<8x64xf32>
    %165 = arith.divf %163, %164 : vector<8x64xf32>
    %166 = vector.extract_strided_slice %165 {offsets = [0, 0], sizes = [8, 32], strides = [1, 1]} : vector<8x64xf32> to vector<8x32xf32>
    %167 = vector.extract_strided_slice %165 {offsets = [0, 32], sizes = [8, 32], strides = [1, 1]} : vector<8x64xf32> to vector<8x32xf32>
    %168 = vector.extract_strided_slice %154 {offsets = [0, 64], sizes = [8, 32], strides = [1, 1]} : vector<8x96xf32> to vector<8x32xf32>
    %169 = arith.mulf %166, %158 : vector<8x32xf32>
    %170 = arith.addf %168, %169 : vector<8x32xf32>
    %171 = math.tanh %170 : vector<8x32xf32>
    %cst_53 = arith.constant 1.000000e+00 : f32
    %172 = vector.broadcast %cst_53 : f32 to vector<8x32xf32>
    %173 = arith.subf %172, %167 : vector<8x32xf32>
    %174 = arith.mulf %173, %171 : vector<8x32xf32>
    %175 = arith.mulf %167, %148 : vector<8x32xf32>
    %176 = arith.addf %174, %175 : vector<8x32xf32>
    %177 = arith.index_cast %152 : i32 to index
    %c0_54 = arith.constant 0 : index
    %178 = vector.load %arg11[%177, %c0_54] : memref<64x32xf32, #tpu.memory_space<vmem>>, vector<8x32xf32>
    tpu.vector_store %arg11[%177, %c0_54], %176 {strides = array<i32>} : memref<64x32xf32, #tpu.memory_space<vmem>>, vector<8x32xf32>,
    %c6_i32 = arith.constant 6 : i32
    %c8_i32_55 = arith.constant 8 : i32
    %179 = arith.muli %c6_i32, %c8_i32_55 : i32
    %180 = tpu.assume_multiple %179, 8 : i32
    %181 = arith.index_cast %180 : i32 to index
    %c0_56 = arith.constant 0 : index
    %182 = vector.load %arg10[%181, %c0_56] : memref<64x96xf32, #tpu.memory_space<vmem>>, vector<8x96xf32>
    %cst_57 = arith.constant dense<0.000000e+00> : vector<8x64xf32>
    %183 = tpu.matmul %176, %7, %cst_57 {dimension_numbers = #tpu.dot_dimension_numbers<[1], [0], [0], [1], [0, 0, 1, 1], [], []>} : vector<8x32xf32>, vector<32x64xf32>, vector<8x64xf32> -> vector<8x64xf32>
    %cst_58 = arith.constant dense<0.000000e+00> : vector<8x32xf32>
    %184 = tpu.matmul %176, %8, %cst_58 {dimension_numbers = #tpu.dot_dimension_numbers<[1], [0], [0], [1], [0, 0, 1, 1], [], []>} : vector<8x32xf32>, vector<32x32xf32>, vector<8x32xf32> -> vector<8x32xf32>
    %185 = vector.broadcast %9 : vector<1x32xf32> to vector<8x32xf32>
    %186 = arith.addf %184, %185 : vector<8x32xf32>
    %187 = vector.extract_strided_slice %182 {offsets = [0, 0], sizes = [8, 64], strides = [1, 1]} : vector<8x96xf32> to vector<8x64xf32>
    %188 = arith.addf %187, %183 : vector<8x64xf32>
    %189 = arith.negf %188 : vector<8x64xf32>
    %190 = math.exp %189 : vector<8x64xf32>
    %cst_59 = arith.constant 1.000000e+00 : f32
    %191 = vector.broadcast %cst_59 : f32 to vector<8x64xf32>
    %192 = arith.addf %191, %190 : vector<8x64xf32>
    %193 = arith.divf %191, %192 : vector<8x64xf32>
    %194 = vector.extract_strided_slice %193 {offsets = [0, 0], sizes = [8, 32], strides = [1, 1]} : vector<8x64xf32> to vector<8x32xf32>
    %195 = vector.extract_strided_slice %193 {offsets = [0, 32], sizes = [8, 32], strides = [1, 1]} : vector<8x64xf32> to vector<8x32xf32>
    %196 = vector.extract_strided_slice %182 {offsets = [0, 64], sizes = [8, 32], strides = [1, 1]} : vector<8x96xf32> to vector<8x32xf32>
    %197 = arith.mulf %194, %186 : vector<8x32xf32>
    %198 = arith.addf %196, %197 : vector<8x32xf32>
    %199 = math.tanh %198 : vector<8x32xf32>
    %cst_60 = arith.constant 1.000000e+00 : f32
    %200 = vector.broadcast %cst_60 : f32 to vector<8x32xf32>
    %201 = arith.subf %200, %195 : vector<8x32xf32>
    %202 = arith.mulf %201, %199 : vector<8x32xf32>
    %203 = arith.mulf %195, %176 : vector<8x32xf32>
    %204 = arith.addf %202, %203 : vector<8x32xf32>
    %205 = arith.index_cast %180 : i32 to index
    %c0_61 = arith.constant 0 : index
    %206 = vector.load %arg11[%205, %c0_61] : memref<64x32xf32, #tpu.memory_space<vmem>>, vector<8x32xf32>
    tpu.vector_store %arg11[%205, %c0_61], %204 {strides = array<i32>} : memref<64x32xf32, #tpu.memory_space<vmem>>, vector<8x32xf32>,
    %c7_i32 = arith.constant 7 : i32
    %c8_i32_62 = arith.constant 8 : i32
    %207 = arith.muli %c7_i32, %c8_i32_62 : i32
    %208 = tpu.assume_multiple %207, 8 : i32
    %209 = arith.index_cast %208 : i32 to index
    %c0_63 = arith.constant 0 : index
    %210 = vector.load %arg10[%209, %c0_63] : memref<64x96xf32, #tpu.memory_space<vmem>>, vector<8x96xf32>
    %cst_64 = arith.constant dense<0.000000e+00> : vector<8x64xf32>
    %211 = tpu.matmul %204, %7, %cst_64 {dimension_numbers = #tpu.dot_dimension_numbers<[1], [0], [0], [1], [0, 0, 1, 1], [], []>} : vector<8x32xf32>, vector<32x64xf32>, vector<8x64xf32> -> vector<8x64xf32>
    %cst_65 = arith.constant dense<0.000000e+00> : vector<8x32xf32>
    %212 = tpu.matmul %204, %8, %cst_65 {dimension_numbers = #tpu.dot_dimension_numbers<[1], [0], [0], [1], [0, 0, 1, 1], [], []>} : vector<8x32xf32>, vector<32x32xf32>, vector<8x32xf32> -> vector<8x32xf32>
    %213 = vector.broadcast %9 : vector<1x32xf32> to vector<8x32xf32>
    %214 = arith.addf %212, %213 : vector<8x32xf32>
    %215 = vector.extract_strided_slice %210 {offsets = [0, 0], sizes = [8, 64], strides = [1, 1]} : vector<8x96xf32> to vector<8x64xf32>
    %216 = arith.addf %215, %211 : vector<8x64xf32>
    %217 = arith.negf %216 : vector<8x64xf32>
    %218 = math.exp %217 : vector<8x64xf32>
    %cst_66 = arith.constant 1.000000e+00 : f32
    %219 = vector.broadcast %cst_66 : f32 to vector<8x64xf32>
    %220 = arith.addf %219, %218 : vector<8x64xf32>
    %221 = arith.divf %219, %220 : vector<8x64xf32>
    %222 = vector.extract_strided_slice %221 {offsets = [0, 0], sizes = [8, 32], strides = [1, 1]} : vector<8x64xf32> to vector<8x32xf32>
    %223 = vector.extract_strided_slice %221 {offsets = [0, 32], sizes = [8, 32], strides = [1, 1]} : vector<8x64xf32> to vector<8x32xf32>
    %224 = vector.extract_strided_slice %210 {offsets = [0, 64], sizes = [8, 32], strides = [1, 1]} : vector<8x96xf32> to vector<8x32xf32>
    %225 = arith.mulf %222, %214 : vector<8x32xf32>
    %226 = arith.addf %224, %225 : vector<8x32xf32>
    %227 = math.tanh %226 : vector<8x32xf32>
    %cst_67 = arith.constant 1.000000e+00 : f32
    %228 = vector.broadcast %cst_67 : f32 to vector<8x32xf32>
    %229 = arith.subf %228, %223 : vector<8x32xf32>
    %230 = arith.mulf %229, %227 : vector<8x32xf32>
    %231 = arith.mulf %223, %204 : vector<8x32xf32>
    %232 = arith.addf %230, %231 : vector<8x32xf32>
    %233 = arith.index_cast %208 : i32 to index
    %c0_68 = arith.constant 0 : index
    %234 = vector.load %arg11[%233, %c0_68] : memref<64x32xf32, #tpu.memory_space<vmem>>, vector<8x32xf32>
    tpu.vector_store %arg11[%233, %c0_68], %232 {strides = array<i32>} : memref<64x32xf32, #tpu.memory_space<vmem>>, vector<8x32xf32>,
    %c8_i32_69 = arith.constant 8 : i32
    %c0_70 = arith.constant 0 : index
    %c0_71 = arith.constant 0 : index
    %235 = vector.load %arg11[%c0_70, %c0_71] : memref<64x32xf32, #tpu.memory_space<vmem>>, vector<64x32xf32>
    %c0_72 = arith.constant 0 : index
    %c0_73 = arith.constant 0 : index
    %236 = vector.load %arg7[%c0_72, %c0_73] : memref<32x128xf32, #tpu.memory_space<vmem>>, vector<32x128xf32>
    %cst_74 = arith.constant dense<0.000000e+00> : vector<64x128xf32>
    %237 = tpu.matmul %235, %236, %cst_74 {dimension_numbers = #tpu.dot_dimension_numbers<[1], [0], [0], [1], [0, 0, 1, 1], [], []>} : vector<64x32xf32>, vector<32x128xf32>, vector<64x128xf32> -> vector<64x128xf32>
    %c0_75 = arith.constant 0 : index
    %c0_76 = arith.constant 0 : index
    %238 = vector.load %arg8[%c0_75, %c0_76] : memref<1x128xf32, #tpu.memory_space<vmem>>, vector<1x128xf32>
    %239 = vector.broadcast %238 : vector<1x128xf32> to vector<64x128xf32>
    %240 = arith.addf %237, %239 : vector<64x128xf32>
    %c0_77 = arith.constant 0 : index
    %c0_78 = arith.constant 0 : index
    %241 = vector.load %arg9[%c0_77, %c0_78] : memref<64x128xf32, #tpu.memory_space<vmem>>, vector<64x128xf32>
    tpu.vector_store %arg9[%c0_77, %c0_78], %240 {strides = array<i32>} : memref<64x128xf32, #tpu.memory_space<vmem>>, vector<64x128xf32>,
    return
  }
  func.func @transform_0(%arg0: i32) -> (i32, i32) {
    %c0_i32 = arith.constant 0 : i32
    %c0_i32_0 = arith.constant 0 : i32
    %c0_i32_1 = arith.constant 0 : i32
    return %c0_i32, %c0_i32_0 : i32, i32
  }
  func.func @transform_1(%arg0: i32) -> (i32, i32) {
    %c0_i32 = arith.constant 0 : i32
    %c0_i32_0 = arith.constant 0 : i32
    %c0_i32_1 = arith.constant 0 : i32
    return %c0_i32, %c0_i32_0 : i32, i32
  }
  func.func @transform_2(%arg0: i32) -> (i32, i32) {
    %c0_i32 = arith.constant 0 : i32
    %c0_i32_0 = arith.constant 0 : i32
    %c0_i32_1 = arith.constant 0 : i32
    return %c0_i32, %c0_i32_0 : i32, i32
  }
  func.func @transform_3(%arg0: i32) -> (i32, i32) {
    %c0_i32 = arith.constant 0 : i32
    %c0_i32_0 = arith.constant 0 : i32
    %c0_i32_1 = arith.constant 0 : i32
    return %c0_i32, %c0_i32_0 : i32, i32
  }
  func.func @transform_4(%arg0: i32) -> (i32, i32) {
    %c0_i32 = arith.constant 0 : i32
    %c0_i32_0 = arith.constant 0 : i32
    %c0_i32_1 = arith.constant 0 : i32
    return %c0_i32, %c0_i32_0 : i32, i32
  }
  func.func @transform_5(%arg0: i32) -> (i32, i32) {
    %c0_i32 = arith.constant 0 : i32
    %c0_i32_0 = arith.constant 0 : i32
    %c0_i32_1 = arith.constant 0 : i32
    return %c0_i32, %c0_i32_0 : i32, i32
  }
  func.func @transform_6(%arg0: i32) -> (i32, i32) {
    %c0_i32 = arith.constant 0 : i32
    %c0_i32_0 = arith.constant 0 : i32
    %c0_i32_1 = arith.constant 0 : i32
    return %c0_i32, %c0_i32_0 : i32, i32
  }
  func.func @transform_7(%arg0: i32) -> (i32, i32) {
    %c0_i32 = arith.constant 0 : i32
    %c0_i32_0 = arith.constant 0 : i32
    %c0_i32_1 = arith.constant 0 : i32
    return %c0_i32, %c0_i32_0 : i32, i32
  }
  func.func @transform_8(%arg0: i32) -> (i32, i32) {
    %c0_i32 = arith.constant 0 : i32
    %c0_i32_0 = arith.constant 0 : i32
    %c0_i32_1 = arith.constant 0 : i32
    return %c0_i32, %c0_i32_0 : i32, i32
  }
}

</mosaic_0001>

<llo_original>
// kernel: tpu_custom_call.1
$region0: #{tpu_custom_call.1}
  #allocation0 [shape = 'u32[]', space=smem, size = 0x4, offset = 0x4, fixed_abs, tag = 'smem constant byte address 0x4 - core index']
  #allocation1 [shape = 'u32[144,128]{1,0:T(1,128)}', space=vmem, size = 0x12000, scoped, tag = 'internal scratch']
  #allocation2 [shape = 'f32[64,96]{1,0:T(8,128)}', space=vmem, size = 0x8000, scoped, tag = 'scratch operand']
  #allocation3 [shape = 'f32[64,32]{1,0:T(8,128)}', space=vmem, size = 0x8000, scoped, tag = 'scratch operand']
  %s0 = inlined_call_operand.vmem [shape: f32[64,10], index: 0, kind: input, shape index: {}]
  %s1 = inlined_call_operand.hbm [shape: f32[10,96], index: 1, kind: input, shape index: {}]
  %s2 = inlined_call_operand.vmem [shape: f32[1,96], index: 2, kind: input, shape index: {}]
  %s3 = inlined_call_operand.vmem [shape: f32[32,64], index: 3, kind: input, shape index: {}]
  %s4 = inlined_call_operand.vmem [shape: f32[32,32], index: 4, kind: input, shape index: {}]
  %s5 = inlined_call_operand.vmem [shape: f32[1,32], index: 5, kind: input, shape index: {}]
  %s6 = inlined_call_operand.vmem [shape: f32[32,128], index: 6, kind: input, shape index: {}]
  %s7 = inlined_call_operand.vmem [shape: f32[1,128], index: 7, kind: input, shape index: {}]
  %s8 = inlined_call_operand.hbm [shape: f32[64,128], index: 8, kind: output, shape index: {}]
  %s9 = sld [smem:[#allocation0]]
  $region46: #{tpu_custom_call.1} parent=0
    _
  %s11 = ssub.s32 1, %s9
  %s12 = scalar_select 0, %s11, %s9
  $region1: #{tpu_custom_call.1} parent=0
    #allocation4 [shape = 'u8[8192]{0}', space=vmem, size = 0x2000, scoped, tag = 'input window, operand 1, single buffered']
    #allocation5 [shape = 's32[1]{0}', space=sflag, size = 0x4, scoped, tag = 'scoped memory for tpu_custom_call.1']
    #allocation6 [shape = 's32[1]{0}', space=sflag, size = 0x4, scoped, tag = 'scoped memory for tpu_custom_call.1']
    #allocation7 [shape = 'u8[32768]{0}', space=vmem, size = 0x8000, scoped, tag = 'output window, operand 0, single buffered']
    %13 = vsyncpa [#allocation5], 0
    %14 = vsyncpa [#allocation6], 0
    // Predicated region
    $region2: #{tpu_custom_call.1} parent=1 // pred_check
      _
    $region3: #{tpu_custom_call.1} parent=1 // pred_check_branch
      %16 = sbr.rel (0) target = $region5
    $region4: #{tpu_custom_call.1} parent=1 // pred_region
      _
    $region5: #{tpu_custom_call.1} parent=1 // pred_fallthru
      _
    // Predicated region
    $region6: #{tpu_custom_call.1} parent=1 // pred_check
      _
    $region7: #{tpu_custom_call.1} parent=1 // pred_check_branch
      %18 = sbr.rel (0) target = $region9
    $region8: #{tpu_custom_call.1} parent=1 // pred_region
      %s20 = ssub.s32 256, 256
      %21 = vsyncadd [#allocation5], %s20
      %s22 = sshll.u32 [#allocation4], 4
      %s23 = int_to_ptr.vmem [resolvable:$true] %s22
      %28 = dma.hbm_to_vmem [thread:$0]  %s1, 256, %s23, [#allocation5], 128, 128, 8
    $region9: #{tpu_custom_call.1} parent=1 // pred_fallthru
      _
    // Predicated region
    $region10: #{tpu_custom_call.1} parent=1 // pred_check
      _
    $region11: #{tpu_custom_call.1} parent=1 // pred_check_branch
      %30 = sbr.rel (0) target = $region13
    $region12: #{tpu_custom_call.1} parent=1 // pred_region
      _
    $region13: #{tpu_custom_call.1} parent=1 // pred_fallthru
      _
    // Predicated region
    $region14: #{tpu_custom_call.1} parent=1 // pred_check
      _
    $region15: #{tpu_custom_call.1} parent=1 // pred_check_branch
      %32 = sbr.rel (0) target = $region17
    $region16: #{tpu_custom_call.1} parent=1 // pred_region
      _
    $region17: #{tpu_custom_call.1} parent=1 // pred_fallthru
      _
    // Predicated region
    $region18: #{tpu_custom_call.1} parent=1 // pred_check
      _
    $region19: #{tpu_custom_call.1} parent=1 // pred_check_branch
      %34 = sbr.rel (0) target = $region21
    $region20: #{tpu_custom_call.1} parent=1 // pred_region
      _
    $region21: #{tpu_custom_call.1} parent=1 // pred_fallthru
      _
    // Predicated region
    $region22: #{tpu_custom_call.1} parent=1 // pred_check
      _
    $region23: #{tpu_custom_call.1} parent=1 // pred_check_branch
      %36 = sbr.rel (0) target = $region25
    $region24: #{tpu_custom_call.1} parent=1 // pred_region
      _
    $region25: #{tpu_custom_call.1} parent=1 // pred_fallthru
      _
    // Predicated region
    $region26: #{tpu_custom_call.1} parent=1 // pred_check
      _
    $region27: #{tpu_custom_call.1} parent=1 // pred_check_branch
      %38 = sbr.rel (0) target = $region29
    $region28: #{tpu_custom_call.1} parent=1 // pred_region
      _
    $region29: #{tpu_custom_call.1} parent=1 // pred_fallthru
      _
    // Predicated region
    $region30: #{tpu_custom_call.1} parent=1 // pred_check
      _
    $region31: #{tpu_custom_call.1} parent=1 // pred_check_branch
      %40 = sbr.rel (0) target = $region33
    $region32: #{tpu_custom_call.1} parent=1 // pred_region
      _
    $region33: #{tpu_custom_call.1} parent=1 // pred_fallthru
      _
    // Predicated region
    $region34: #{tpu_custom_call.1} parent=1 // pred_check
      _
    $region35: #{tpu_custom_call.1} parent=1 // pred_check_branch
      %42 = sbr.rel (0) target = $region37
    $region36: #{tpu_custom_call.1} parent=1 // pred_region
      %43 = dma.done [#allocation5], 256
    $region37: #{tpu_custom_call.1} parent=1 // pred_fallthru
      _
    %v44 = vld [vmem:[%s0] sm:$0xff]
    %v45 = vld [vmem:[%s0 + $0x8] sm:$0xff]
    %v46 = vld [vmem:[%s0 + $0x10] sm:$0xff]
    %v47 = vld [vmem:[%s0 + $0x18] sm:$0xff]
    %v48 = vld [vmem:[%s0 + $0x20] sm:$0xff]
    %v49 = vld [vmem:[%s0 + $0x28] sm:$0xff]
    %v50 = vld [vmem:[%s0 + $0x30] sm:$0xff]
    %v51 = vld [vmem:[%s0 + $0x38] sm:$0xff]
    %v52 = vld [vmem:[#allocation4] sm:$0xff]
    %v53 = vld [vmem:[#allocation4 + $0x8] sm:$0x3]
    %v54 = vld [vmem:[%s2] sm:$0x1]
    %v56 = vlaneseq
    %v57 = vshrl.u32 %v56, 7
    %v58 = vsub.s32 0, %v57
    %v59 = vrot.slane %v54, %v58
    %vm61 = vcmask 80896
    %v63 = vsel %vm61, %v44, 0
    %v66 = vsel %vm61, %v45, 0
    %v69 = vsel %vm61, %v46, 0
    %v72 = vsel %vm61, %v47, 0
    %v75 = vsel %vm61, %v48, 0
    %v78 = vsel %vm61, %v49, 0
    %v81 = vsel %vm61, %v50, 0
    %v84 = vsel %vm61, %v51, 0
    %vm86 = vcmask 1041408
    %v88 = vsel %vm86, %v53, 0
    %90 = vmatprep.subr.mxu0 0.0
    %91 = vmatpush1.msra.mxu0 %v52
    %92 = vmatprep.subr.mxu0 0.0
    %93 = vmatpush1.msra.mxu0 %v88
    %94 = vmatprep.subr.mxu0 0.0
    %95 = vmatpush1.msra.mxu0 0.0
    %96 = vmatprep.subr.mxu0 0.0
    %97 = vmatpush1.msra.mxu0 0.0
    %98 = vmatprep.subr.mxu0 0.0
    %99 = vmatpush1.msra.mxu0 0.0
    %100 = vmatprep.subr.mxu0 0.0
    %101 = vmatpush1.msra.mxu0 0.0
    %102 = vmatprep.subr.mxu0 0.0
    %103 = vmatpush1.msra.mxu0 0.0
    %104 = vmatprep.subr.mxu0 0.0
    %105 = vmatpush1.msra.mxu0 0.0
    %106 = vmatprep.subr.mxu0 0.0
    %107 = vmatpush1.msra.mxu0 0.0
    %108 = vmatprep.subr.mxu0 0.0
    %109 = vmatpush1.msra.mxu0 0.0
    %110 = vmatprep.subr.mxu0 0.0
    %111 = vmatpush1.msra.mxu0 0.0
    %112 = vmatprep.subr.mxu0 0.0
    %113 = vmatpush1.msra.mxu0 0.0
    %114 = vmatprep.subr.mxu0 0.0
    %115 = vmatpush1.msra.mxu0 0.0
    %116 = vmatprep.subr.mxu0 0.0
    %117 = vmatpush1.msra.mxu0 0.0
    %118 = vmatprep.subr.mxu0 0.0
    %119 = vmatpush1.msra.mxu0 0.0
    %120 = vmatprep.subr.mxu0 0.0
    %121 = vmatpush1.msra.mxu0 0.0
    %122 = vmatprep.subr.mxu0 0.0
    %123 = vmatpush1.msra.mxu0 0.0
    %124 = vmatprep.subr.mxu0 0.0
    %125 = vmatpush1.msra.mxu0 0.0
    %126 = vmatprep.subr.mxu0 0.0
    %127 = vmatpush1.msra.mxu0 0.0
    %128 = vmatprep.subr.mxu0 0.0
    %129 = vmatpush1.msra.mxu0 0.0
    %130 = vmatprep.subr.mxu0 0.0
    %131 = vmatpush1.msra.mxu0 0.0
    %132 = vmatprep.subr.mxu0 0.0
    %133 = vmatpush1.msra.mxu0 0.0
    %134 = vmatprep.subr.mxu0 0.0
    %135 = vmatpush1.msra.mxu0 0.0
    %136 = vmatprep.subr.mxu0 0.0
    %137 = vmatpush1.msra.mxu0 0.0
    %138 = vmatprep.subr.mxu0 0.0
    %139 = vmatpush1.msra.mxu0 0.0
    %140 = vmatprep.subr.mxu0 0.0
    %141 = vmatpush1.msra.mxu0 0.0
    %142 = vmatprep.subr.mxu0 0.0
    %143 = vmatpush1.msra.mxu0 0.0
    %144 = vmatprep.subr.mxu0 0.0
    %145 = vmatpush1.msra.mxu0 0.0
    %146 = vmatprep.subr.mxu0 0.0
    %147 = vmatpush1.msra.mxu0 0.0
    %148 = vmatprep.subr.mxu0 0.0
    %149 = vmatpush1.msra.mxu0 0.0
    %150 = vmatprep.subr.mxu0 0.0
    %151 = vmatpush1.msra.mxu0 0.0
    %152 = vmatprep.subr.mxu0 0.0
    %153 = vmatpush1.msra.mxu0 0.0
    %154 = vmatprep.mubr.f32.mxu0 0.0
    %155 = vmatmul.mubr.f32.gmra.mrb[0].mxu0 %v63
    %v156 = vpop.f32.mrb[0].mxu0
    %v157 = vadd.f32 %v59, %v156
    %v158 = vpop.f32.mrb[0].mxu0
    %159 = vmatprep.mubr.f32.mxu0 0.0
    %160 = vmatmul.mubr.f32.gmra.mrb[0].mxu0 %v66
    %v161 = vpop.f32.mrb[0].mxu0
    %v162 = vadd.f32 %v59, %v161
    %v163 = vpop.f32.mrb[0].mxu0
    %164 = vmatprep.mubr.f32.mxu0 0.0
    %165 = vmatmul.mubr.f32.gmra.mrb[0].mxu0 %v69
    %v166 = vpop.f32.mrb[0].mxu0
    %v167 = vadd.f32 %v59, %v166
    %v168 = vpop.f32.mrb[0].mxu0
    %169 = vmatprep.mubr.f32.mxu0 0.0
    %170 = vmatmul.mubr.f32.gmra.mrb[0].mxu0 %v72
    %v171 = vpop.f32.mrb[0].mxu0
    %v172 = vadd.f32 %v59, %v171
    %v173 = vpop.f32.mrb[0].mxu0
    %174 = vmatprep.mubr.f32.mxu0 0.0
    %175 = vmatmul.mubr.f32.gmra.mrb[0].mxu0 %v75
    %v176 = vpop.f32.mrb[0].mxu0
    %v177 = vadd.f32 %v59, %v176
    %v178 = vpop.f32.mrb[0].mxu0
    %179 = vmatprep.mubr.f32.mxu0 0.0
    %180 = vmatmul.mubr.f32.gmra.mrb[0].mxu0 %v78
    %v181 = vpop.f32.mrb[0].mxu0
    %v182 = vadd.f32 %v59, %v181
    %v183 = vpop.f32.mrb[0].mxu0
    %184 = vmatprep.mubr.f32.mxu0 0.0
    %185 = vmatmul.mubr.f32.gmra.mrb[0].mxu0 %v81
    %v186 = vpop.f32.mrb[0].mxu0
    %v187 = vadd.f32 %v59, %v186
    %v188 = vpop.f32.mrb[0].mxu0
    %189 = vmatprep.mubr.f32.mxu0 0.0
    %190 = vmatmul.mubr.f32.gmra.mrb[0].mxu0 %v84
    %v191 = vpop.f32.mrb[0].mxu0
    %v192 = vadd.f32 %v59, %v191
    %v193 = vpop.f32.mrb[0].mxu0
    %194 = vdwg.mxu0
    %vm195 = vcmask 785408
    %196 = vst.msk [vmem:[#allocation2] sm:$0xff] %vm195, %v157
    %197 = vst.msk [vmem:[#allocation2 + $0x8] sm:$0xff] %vm195, %v162
    %198 = vst.msk [vmem:[#allocation2 + $0x10] sm:$0xff] %vm195, %v167
    %199 = vst.msk [vmem:[#allocation2 + $0x18] sm:$0xff] %vm195, %v172
    %200 = vst.msk [vmem:[#allocation2 + $0x20] sm:$0xff] %vm195, %v177
    %201 = vst.msk [vmem:[#allocation2 + $0x28] sm:$0xff] %vm195, %v182
    %202 = vst.msk [vmem:[#allocation2 + $0x30] sm:$0xff] %vm195, %v187
    %203 = vst.msk [vmem:[#allocation2 + $0x38] sm:$0xff] %vm195, %v192
    %v204 = vld [vmem:[%s3] sm:$0xff]
    %v205 = vld [vmem:[%s3 + $0x8] sm:$0xff]
    %v206 = vld [vmem:[%s3 + $0x10] sm:$0xff]
    %v207 = vld [vmem:[%s3 + $0x18] sm:$0xff]
    %v208 = vld [vmem:[%s4] sm:$0xff]
    %v209 = vld [vmem:[%s4 + $0x8] sm:$0xff]
    %v210 = vld [vmem:[%s4 + $0x10] sm:$0xff]
    %v211 = vld [vmem:[%s4 + $0x18] sm:$0xff]
    %v212 = vld [vmem:[%s5] sm:$0x1]
    %v213 = vld [vmem:[#allocation2] sm:$0xff]
    %vm214 = vcmask 261120
    %v216 = vsel %vm214, 0.0, 0
    %218 = vmatprep.subr.mxu0 0.0
    %219 = vmatpush1.msra.mxu0 %v204
    %220 = vmatprep.subr.mxu0 0.0
    %221 = vmatpush1.msra.mxu0 %v205
    %222 = vmatprep.subr.mxu0 0.0
    %223 = vmatpush1.msra.mxu0 %v206
    %224 = vmatprep.subr.mxu0 0.0
    %225 = vmatpush1.msra.mxu0 %v207
    %226 = vmatprep.subr.mxu0 0.0
    %227 = vmatpush1.msra.mxu0 0.0
    %228 = vmatprep.subr.mxu0 0.0
    %229 = vmatpush1.msra.mxu0 0.0
    %230 = vmatprep.subr.mxu0 0.0
    %231 = vmatpush1.msra.mxu0 0.0
    %232 = vmatprep.subr.mxu0 0.0
    %233 = vmatpush1.msra.mxu0 0.0
    %234 = vmatprep.subr.mxu0 0.0
    %235 = vmatpush1.msra.mxu0 0.0
    %236 = vmatprep.subr.mxu0 0.0
    %237 = vmatpush1.msra.mxu0 0.0
    %238 = vmatprep.subr.mxu0 0.0
    %239 = vmatpush1.msra.mxu0 0.0
    %240 = vmatprep.subr.mxu0 0.0
    %241 = vmatpush1.msra.mxu0 0.0
    %242 = vmatprep.subr.mxu0 0.0
    %243 = vmatpush1.msra.mxu0 0.0
    %244 = vmatprep.subr.mxu0 0.0
    %245 = vmatpush1.msra.mxu0 0.0
    %246 = vmatprep.subr.mxu0 0.0
    %247 = vmatpush1.msra.mxu0 0.0
    %248 = vmatprep.subr.mxu0 0.0
    %249 = vmatpush1.msra.mxu0 0.0
    %250 = vmatprep.subr.mxu0 0.0
    %251 = vmatpush1.msra.mxu0 0.0
    %252 = vmatprep.subr.mxu0 0.0
    %253 = vmatpush1.msra.mxu0 0.0
    %254 = vmatprep.subr.mxu0 0.0
    %255 = vmatpush1.msra.mxu0 0.0
    %256 = vmatprep.subr.mxu0 0.0
    %257 = vmatpush1.msra.mxu0 0.0
    %258 = vmatprep.subr.mxu0 0.0
    %259 = vmatpush1.msra.mxu0 0.0
    %260 = vmatprep.subr.mxu0 0.0
    %261 = vmatpush1.msra.mxu0 0.0
    %262 = vmatprep.subr.mxu0 0.0
    %263 = vmatpush1.msra.mxu0 0.0
    %264 = vmatprep.subr.mxu0 0.0
    %265 = vmatpush1.msra.mxu0 0.0
    %266 = vmatprep.subr.mxu0 0.0
    %267 = vmatpush1.msra.mxu0 0.0
    %268 = vmatprep.subr.mxu0 0.0
    %269 = vmatpush1.msra.mxu0 0.0
    %270 = vmatprep.subr.mxu0 0.0
    %271 = vmatpush1.msra.mxu0 0.0
    %272 = vmatprep.subr.mxu0 0.0
    %273 = vmatpush1.msra.mxu0 0.0
    %274 = vmatprep.subr.mxu0 0.0
    %275 = vmatpush1.msra.mxu0 0.0
    %276 = vmatprep.subr.mxu0 0.0
    %277 = vmatpush1.msra.mxu0 0.0
    %278 = vmatprep.subr.mxu0 0.0
    %279 = vmatpush1.msra.mxu0 0.0
    %280 = vmatprep.subr.mxu0 0.0
    %281 = vmatpush1.msra.mxu0 0.0
    %282 = vmatprep.mubr.f32.mxu0 0.0
    %283 = vmatmul.mubr.f32.gmra.mrb[0].mxu0 %v216
    %v284 = vpop.f32.mrb[0].mxu0
    %v285 = vadd.f32 0.0, %v284
    %v286 = vpop.f32.mrb[0].mxu0
    %287 = vdwg.mxu0
    %v289 = vlaneseq
    %v290 = vshrl.u32 %v289, 7
    %v291 = vsub.s32 0, %v290
    %v292 = vrot.slane %v212, %v291
    %294 = vmatprep.subr.mxu0 0.0
    %295 = vmatpush1.msra.mxu0 %v208
    %296 = vmatprep.subr.mxu0 0.0
    %297 = vmatpush1.msra.mxu0 %v209
    %298 = vmatprep.subr.mxu0 0.0
    %299 = vmatpush1.msra.mxu0 %v210
    %300 = vmatprep.subr.mxu0 0.0
    %301 = vmatpush1.msra.mxu0 %v211
    %302 = vmatprep.subr.mxu0 0.0
    %303 = vmatpush1.msra.mxu0 0.0
    %304 = vmatprep.subr.mxu0 0.0
    %305 = vmatpush1.msra.mxu0 0.0
    %306 = vmatprep.subr.mxu0 0.0
    %307 = vmatpush1.msra.mxu0 0.0
    %308 = vmatprep.subr.mxu0 0.0
    %309 = vmatpush1.msra.mxu0 0.0
    %310 = vmatprep.subr.mxu0 0.0
    %311 = vmatpush1.msra.mxu0 0.0
    %312 = vmatprep.subr.mxu0 0.0
    %313 = vmatpush1.msra.mxu0 0.0
    %314 = vmatprep.subr.mxu0 0.0
    %315 = vmatpush1.msra.mxu0 0.0
    %316 = vmatprep.subr.mxu0 0.0
    %317 = vmatpush1.msra.mxu0 0.0
    %318 = vmatprep.subr.mxu0 0.0
    %319 = vmatpush1.msra.mxu0 0.0
    %320 = vmatprep.subr.mxu0 0.0
    %321 = vmatpush1.msra.mxu0 0.0
    %322 = vmatprep.subr.mxu0 0.0
    %323 = vmatpush1.msra.mxu0 0.0
    %324 = vmatprep.subr.mxu0 0.0
    %325 = vmatpush1.msra.mxu0 0.0
    %326 = vmatprep.subr.mxu0 0.0
    %327 = vmatpush1.msra.mxu0 0.0
    %328 = vmatprep.subr.mxu0 0.0
    %329 = vmatpush1.msra.mxu0 0.0
    %330 = vmatprep.subr.mxu0 0.0
    %331 = vmatpush1.msra.mxu0 0.0
    %332 = vmatprep.subr.mxu0 0.0
    %333 = vmatpush1.msra.mxu0 0.0
    %334 = vmatprep.subr.mxu0 0.0
    %335 = vmatpush1.msra.mxu0 0.0
    %336 = vmatprep.subr.mxu0 0.0
    %337 = vmatpush1.msra.mxu0 0.0
    %338 = vmatprep.subr.mxu0 0.0
    %339 = vmatpush1.msra.mxu0 0.0
    %340 = vmatprep.subr.mxu0 0.0
    %341 = vmatpush1.msra.mxu0 0.0
    %342 = vmatprep.subr.mxu0 0.0
    %343 = vmatpush1.msra.mxu0 0.0
    %344 = vmatprep.subr.mxu0 0.0
    %345 = vmatpush1.msra.mxu0 0.0
    %346 = vmatprep.subr.mxu0 0.0
    %347 = vmatpush1.msra.mxu0 0.0
    %348 = vmatprep.subr.mxu0 0.0
    %349 = vmatpush1.msra.mxu0 0.0
    %350 = vmatprep.subr.mxu0 0.0
    %351 = vmatpush1.msra.mxu0 0.0
    %352 = vmatprep.subr.mxu0 0.0
    %353 = vmatpush1.msra.mxu0 0.0
    %354 = vmatprep.subr.mxu0 0.0
    %355 = vmatpush1.msra.mxu0 0.0
    %356 = vmatprep.subr.mxu0 0.0
    %357 = vmatpush1.msra.mxu0 0.0
    %358 = vmatprep.mubr.f32.mxu0 0.0
    %359 = vmatmul.mubr.f32.gmra.mrb[0].mxu0 %v216
    %v360 = vpop.f32.mrb[0].mxu0
    %v361 = vadd.f32 %v292, %v360
    %v362 = vpop.f32.mrb[0].mxu0
    %363 = vdwg.mxu0
    %v364 = vadd.f32 %v213, %v285
    %v365 = vxor.u32 %v364, 2147483648
    %v366 = vmul.f32 %v365, 1.442695
    %v367 = vpow.pop %v366
    %v368 = vadd.f32 %v367, 1.0
    %v369 = vrcp.pop %v368
    %v370 = vmul.f32 1.0, %v369
    %v371 = vmul.f32 %v370, %v361
    %373 = vrot.lane.b32.xlu0 %v371, 64
    %v374 = vpop.permute.xlu0 %373
    %v376 = vadd.f32 %v213, %v374
    %v377 = vtanh.pop %v376
    %v378 = vsub.f32 1.0, %v370
    %380 = vrot.lane.b32.xlu0 %v377, 96
    %v381 = vpop.permute.xlu0 %380
    %v383 = vmul.f32 %v378, %v381
    %v384 = vmul.f32 %v370, 0.0
    %v385 = vadd.f32 %v383, %v384
    %387 = vrot.lane.b32.xlu0 %v385, 96
    %v388 = vpop.permute.xlu0 %387
    %390 = vst.msk [vmem:[#allocation3] sm:$0xff] %vm214, %v388
    %s391 = scalar_lea.vmem [#allocation2], 8
    %v392 = vld [vmem:[%s391] sm:$0xff]
    %v393 = vsel %vm214, %v388, 0
    %395 = vmatprep.subr.mxu0 0.0
    %396 = vmatpush1.msra.mxu0 %v204
    %397 = vmatprep.subr.mxu0 0.0
    %398 = vmatpush1.msra.mxu0 %v205
    %399 = vmatprep.subr.mxu0 0.0
    %400 = vmatpush1.msra.mxu0 %v206
    %401 = vmatprep.subr.mxu0 0.0
    %402 = vmatpush1.msra.mxu0 %v207
    %403 = vmatprep.subr.mxu0 0.0
    %404 = vmatpush1.msra.mxu0 0.0
    %405 = vmatprep.subr.mxu0 0.0
    %406 = vmatpush1.msra.mxu0 0.0
    %407 = vmatprep.subr.mxu0 0.0
    %408 = vmatpush1.msra.mxu0 0.0
    %409 = vmatprep.subr.mxu0 0.0
    %410 = vmatpush1.msra.mxu0 0.0
    %411 = vmatprep.subr.mxu0 0.0
    %412 = vmatpush1.msra.mxu0 0.0
    %413 = vmatprep.subr.mxu0 0.0
    %414 = vmatpush1.msra.mxu0 0.0
    %415 = vmatprep.subr.mxu0 0.0
    %416 = vmatpush1.msra.mxu0 0.0
    %417 = vmatprep.subr.mxu0 0.0
    %418 = vmatpush1.msra.mxu0 0.0
    %419 = vmatprep.subr.mxu0 0.0
    %420 = vmatpush1.msra.mxu0 0.0
    %421 = vmatprep.subr.mxu0 0.0
    %422 = vmatpush1.msra.mxu0 0.0
    %423 = vmatprep.subr.mxu0 0.0
    %424 = vmatpush1.msra.mxu0 0.0
    %425 = vmatprep.subr.mxu0 0.0
    %426 = vmatpush1.msra.mxu0 0.0
    %427 = vmatprep.subr.mxu0 0.0
    %428 = vmatpush1.msra.mxu0 0.0
    %429 = vmatprep.subr.mxu0 0.0
    %430 = vmatpush1.msra.mxu0 0.0
    %431 = vmatprep.subr.mxu0 0.0
    %432 = vmatpush1.msra.mxu0 0.0
    %433 = vmatprep.subr.mxu0 0.0
    %434 = vmatpush1.msra.mxu0 0.0
    %435 = vmatprep.subr.mxu0 0.0
    %436 = vmatpush1.msra.mxu0 0.0
    %437 = vmatprep.subr.mxu0 0.0
    %438 = vmatpush1.msra.mxu0 0.0
    %439 = vmatprep.subr.mxu0 0.0
    %440 = vmatpush1.msra.mxu0 0.0
    %441 = vmatprep.subr.mxu0 0.0
    %442 = vmatpush1.msra.mxu0 0.0
    %443 = vmatprep.subr.mxu0 0.0
    %444 = vmatpush1.msra.mxu0 0.0
    %445 = vmatprep.subr.mxu0 0.0
    %446 = vmatpush1.msra.mxu0 0.0
    %447 = vmatprep.subr.mxu0 0.0
    %448 = vmatpush1.msra.mxu0 0.0
    %449 = vmatprep.subr.mxu0 0.0
    %450 = vmatpush1.msra.mxu0 0.0
    %451 = vmatprep.subr.mxu0 0.0
    %452 = vmatpush1.msra.mxu0 0.0
    %453 = vmatprep.subr.mxu0 0.0
    %454 = vmatpush1.msra.mxu0 0.0
    %455 = vmatprep.subr.mxu0 0.0
    %456 = vmatpush1.msra.mxu0 0.0
    %457 = vmatprep.subr.mxu0 0.0
    %458 = vmatpush1.msra.mxu0 0.0
    %459 = vmatprep.mubr.f32.mxu0 0.0
    %460 = vmatmul.mubr.f32.gmra.mrb[0].mxu0 %v393
    %v461 = vpop.f32.mrb[0].mxu0
    %v462 = vadd.f32 0.0, %v461
    %v463 = vpop.f32.mrb[0].mxu0
    %464 = vdwg.mxu0
    %465 = vmatprep.subr.mxu0 0.0
    %466 = vmatpush1.msra.mxu0 %v208
    %467 = vmatprep.subr.mxu0 0.0
    %468 = vmatpush1.msra.mxu0 %v209
    %469 = vmatprep.subr.mxu0 0.0
    %470 = vmatpush1.msra.mxu0 %v210
    %471 = vmatprep.subr.mxu0 0.0
    %472 = vmatpush1.msra.mxu0 %v211
    %473 = vmatprep.subr.mxu0 0.0
    %474 = vmatpush1.msra.mxu0 0.0
    %475 = vmatprep.subr.mxu0 0.0
    %476 = vmatpush1.msra.mxu0 0.0
    %477 = vmatprep.subr.mxu0 0.0
    %478 = vmatpush1.msra.mxu0 0.0
    %479 = vmatprep.subr.mxu0 0.0
    %480 = vmatpush1.msra.mxu0 0.0
    %481 = vmatprep.subr.mxu0 0.0
    %482 = vmatpush1.msra.mxu0 0.0
    %483 = vmatprep.subr.mxu0 0.0
    %484 = vmatpush1.msra.mxu0 0.0
    %485 = vmatprep.subr.mxu0 0.0
    %486 = vmatpush1.msra.mxu0 0.0
    %487 = vmatprep.subr.mxu0 0.0
    %488 = vmatpush1.msra.mxu0 0.0
    %489 = vmatprep.subr.mxu0 0.0
    %490 = vmatpush1.msra.mxu0 0.0
    %491 = vmatprep.subr.mxu0 0.0
    %492 = vmatpush1.msra.mxu0 0.0
    %493 = vmatprep.subr.mxu0 0.0
    %494 = vmatpush1.msra.mxu0 0.0
    %495 = vmatprep.subr.mxu0 0.0
    %496 = vmatpush1.msra.mxu0 0.0
    %497 = vmatprep.subr.mxu0 0.0
    %498 = vmatpush1.msra.mxu0 0.0
    %499 = vmatprep.subr.mxu0 0.0
    %500 = vmatpush1.msra.mxu0 0.0
    %501 = vmatprep.subr.mxu0 0.0
    %502 = vmatpush1.msra.mxu0 0.0
    %503 = vmatprep.subr.mxu0 0.0
    %504 = vmatpush1.msra.mxu0 0.0
    %505 = vmatprep.subr.mxu0 0.0
    %506 = vmatpush1.msra.mxu0 0.0
    %507 = vmatprep.subr.mxu0 0.0
    %508 = vmatpush1.msra.mxu0 0.0
    %509 = vmatprep.subr.mxu0 0.0
    %510 = vmatpush1.msra.mxu0 0.0
    %511 = vmatprep.subr.mxu0 0.0
    %512 = vmatpush1.msra.mxu0 0.0
    %513 = vmatprep.subr.mxu0 0.0
    %514 = vmatpush1.msra.mxu0 0.0
    %515 = vmatprep.subr.mxu0 0.0
    %516 = vmatpush1.msra.mxu0 0.0
    %517 = vmatprep.subr.mxu0 0.0
    %518 = vmatpush1.msra.mxu0 0.0
    %519 = vmatprep.subr.mxu0 0.0
    %520 = vmatpush1.msra.mxu0 0.0
    %521 = vmatprep.subr.mxu0 0.0
    %522 = vmatpush1.msra.mxu0 0.0
    %523 = vmatprep.subr.mxu0 0.0
    %524 = vmatpush1.msra.mxu0 0.0
    %525 = vmatprep.subr.mxu0 0.0
    %526 = vmatpush1.msra.mxu0 0.0
    %527 = vmatprep.subr.mxu0 0.0
    %528 = vmatpush1.msra.mxu0 0.0
    %529 = vmatprep.mubr.f32.mxu0 0.0
    %530 = vmatmul.mubr.f32.gmra.mrb[0].mxu0 %v393
    %v531 = vpop.f32.mrb[0].mxu0
    %v532 = vadd.f32 %v292, %v531
    %v533 = vpop.f32.mrb[0].mxu0
    %534 = vdwg.mxu0
    %v535 = vadd.f32 %v392, %v462
    %v536 = vxor.u32 %v535, 2147483648
    %v537 = vmul.f32 %v536, 1.442695
    %v538 = vpow.pop %v537
    %v539 = vadd.f32 %v538, 1.0
    %v540 = vrcp.pop %v539
    %v541 = vmul.f32 1.0, %v540
    %v542 = vmul.f32 %v541, %v532
    %544 = vrot.lane.b32.xlu0 %v542, 64
    %v545 = vpop.permute.xlu0 %544
    %v547 = vadd.f32 %v392, %v545
    %v548 = vtanh.pop %v547
    %v549 = vsub.f32 1.0, %v541
    %551 = vrot.lane.b32.xlu0 %v548, 96
    %v552 = vpop.permute.xlu0 %551
    %v554 = vmul.f32 %v549, %v552
    %v555 = vmul.f32 %v541, %v385
    %v556 = vadd.f32 %v554, %v555
    %558 = vrot.lane.b32.xlu0 %v556, 96
    %v559 = vpop.permute.xlu0 %558
    %s561 = scalar_lea.vmem [#allocation3], 8
    %562 = vst.msk [vmem:[%s561] sm:$0xff] %vm214, %v559
    %s563 = scalar_lea.vmem [#allocation2], 16
    %v564 = vld [vmem:[%s563] sm:$0xff]
    %v565 = vsel %vm214, %v559, 0
    %567 = vmatprep.subr.mxu0 0.0
    %568 = vmatpush1.msra.mxu0 %v204
    %569 = vmatprep.subr.mxu0 0.0
    %570 = vmatpush1.msra.mxu0 %v205
    %571 = vmatprep.subr.mxu0 0.0
    %572 = vmatpush1.msra.mxu0 %v206
    %573 = vmatprep.subr.mxu0 0.0
    %574 = vmatpush1.msra.mxu0 %v207
    %575 = vmatprep.subr.mxu0 0.0
    %576 = vmatpush1.msra.mxu0 0.0
    %577 = vmatprep.subr.mxu0 0.0
    %578 = vmatpush1.msra.mxu0 0.0
    %579 = vmatprep.subr.mxu0 0.0
    %580 = vmatpush1.msra.mxu0 0.0
    %581 = vmatprep.subr.mxu0 0.0
    %582 = vmatpush1.msra.mxu0 0.0
    %583 = vmatprep.subr.mxu0 0.0
    %584 = vmatpush1.msra.mxu0 0.0
    %585 = vmatprep.subr.mxu0 0.0
    %586 = vmatpush1.msra.mxu0 0.0
    %587 = vmatprep.subr.mxu0 0.0
    %588 = vmatpush1.msra.mxu0 0.0
    %589 = vmatprep.subr.mxu0 0.0
    %590 = vmatpush1.msra.mxu0 0.0
    %591 = vmatprep.subr.mxu0 0.0
    %592 = vmatpush1.msra.mxu0 0.0
    %593 = vmatprep.subr.mxu0 0.0
    %594 = vmatpush1.msra.mxu0 0.0
    %595 = vmatprep.subr.mxu0 0.0
    %596 = vmatpush1.msra.mxu0 0.0
    %597 = vmatprep.subr.mxu0 0.0
    %598 = vmatpush1.msra.mxu0 0.0
    %599 = vmatprep.subr.mxu0 0.0
    %600 = vmatpush1.msra.mxu0 0.0
    %601 = vmatprep.subr.mxu0 0.0
    %602 = vmatpush1.msra.mxu0 0.0
    %603 = vmatprep.subr.mxu0 0.0
    %604 = vmatpush1.msra.mxu0 0.0
    %605 = vmatprep.subr.mxu0 0.0
    %606 = vmatpush1.msra.mxu0 0.0
    %607 = vmatprep.subr.mxu0 0.0
    %608 = vmatpush1.msra.mxu0 0.0
    %609 = vmatprep.subr.mxu0 0.0
    %610 = vmatpush1.msra.mxu0 0.0
    %611 = vmatprep.subr.mxu0 0.0
    %612 = vmatpush1.msra.mxu0 0.0
    %613 = vmatprep.subr.mxu0 0.0
    %614 = vmatpush1.msra.mxu0 0.0
    %615 = vmatprep.subr.mxu0 0.0
    %616 = vmatpush1.msra.mxu0 0.0
    %617 = vmatprep.subr.mxu0 0.0
    %618 = vmatpush1.msra.mxu0 0.0
    %619 = vmatprep.subr.mxu0 0.0
    %620 = vmatpush1.msra.mxu0 0.0
    %621 = vmatprep.subr.mxu0 0.0
    %622 = vmatpush1.msra.mxu0 0.0
    %623 = vmatprep.subr.mxu0 0.0
    %624 = vmatpush1.msra.mxu0 0.0
    %625 = vmatprep.subr.mxu0 0.0
    %626 = vmatpush1.msra.mxu0 0.0
    %627 = vmatprep.subr.mxu0 0.0
    %628 = vmatpush1.msra.mxu0 0.0
    %629 = vmatprep.subr.mxu0 0.0
    %630 = vmatpush1.msra.mxu0 0.0
    %631 = vmatprep.mubr.f32.mxu0 0.0
    %632 = vmatmul.mubr.f32.gmra.mrb[0].mxu0 %v565
    %v633 = vpop.f32.mrb[0].mxu0
    %v634 = vadd.f32 0.0, %v633
    %v635 = vpop.f32.mrb[0].mxu0
    %636 = vdwg.mxu0
    %637 = vmatprep.subr.mxu0 0.0
    %638 = vmatpush1.msra.mxu0 %v208
    %639 = vmatprep.subr.mxu0 0.0
    %640 = vmatpush1.msra.mxu0 %v209
    %641 = vmatprep.subr.mxu0 0.0
    %642 = vmatpush1.msra.mxu0 %v210
    %643 = vmatprep.subr.mxu0 0.0
    %644 = vmatpush1.msra.mxu0 %v211
    %645 = vmatprep.subr.mxu0 0.0
    %646 = vmatpush1.msra.mxu0 0.0
    %647 = vmatprep.subr.mxu0 0.0
    %648 = vmatpush1.msra.mxu0 0.0
    %649 = vmatprep.subr.mxu0 0.0
    %650 = vmatpush1.msra.mxu0 0.0
    %651 = vmatprep.subr.mxu0 0.0
    %652 = vmatpush1.msra.mxu0 0.0
    %653 = vmatprep.subr.mxu0 0.0
    %654 = vmatpush1.msra.mxu0 0.0
    %655 = vmatprep.subr.mxu0 0.0
    %656 = vmatpush1.msra.mxu0 0.0
    %657 = vmatprep.subr.mxu0 0.0
    %658 = vmatpush1.msra.mxu0 0.0
    %659 = vmatprep.subr.mxu0 0.0
    %660 = vmatpush1.msra.mxu0 0.0
    %661 = vmatprep.subr.mxu0 0.0
    %662 = vmatpush1.msra.mxu0 0.0
    %663 = vmatprep.subr.mxu0 0.0
    %664 = vmatpush1.msra.mxu0 0.0
    %665 = vmatprep.subr.mxu0 0.0
    %666 = vmatpush1.msra.mxu0 0.0
    %667 = vmatprep.subr.mxu0 0.0
    %668 = vmatpush1.msra.mxu0 0.0
    %669 = vmatprep.subr.mxu0 0.0
    %670 = vmatpush1.msra.mxu0 0.0
    %671 = vmatprep.subr.mxu0 0.0
    %672 = vmatpush1.msra.mxu0 0.0
    %673 = vmatprep.subr.mxu0 0.0
    %674 = vmatpush1.msra.mxu0 0.0
    %675 = vmatprep.subr.mxu0 0.0
    %676 = vmatpush1.msra.mxu0 0.0
    %677 = vmatprep.subr.mxu0 0.0
    %678 = vmatpush1.msra.mxu0 0.0
    %679 = vmatprep.subr.mxu0 0.0
    %680 = vmatpush1.msra.mxu0 0.0
    %681 = vmatprep.subr.mxu0 0.0
    %682 = vmatpush1.msra.mxu0 0.0
    %683 = vmatprep.subr.mxu0 0.0
    %684 = vmatpush1.msra.mxu0 0.0
    %685 = vmatprep.subr.mxu0 0.0
    %686 = vmatpush1.msra.mxu0 0.0
    %687 = vmatprep.subr.mxu0 0.0
    %688 = vmatpush1.msra.mxu0 0.0
    %689 = vmatprep.subr.mxu0 0.0
    %690 = vmatpush1.msra.mxu0 0.0
    %691 = vmatprep.subr.mxu0 0.0
    %692 = vmatpush1.msra.mxu0 0.0
    %693 = vmatprep.subr.mxu0 0.0
    %694 = vmatpush1.msra.mxu0 0.0
    %695 = vmatprep.subr.mxu0 0.0
    %696 = vmatpush1.msra.mxu0 0.0
    %697 = vmatprep.subr.mxu0 0.0
    %698 = vmatpush1.msra.mxu0 0.0
    %699 = vmatprep.subr.mxu0 0.0
    %700 = vmatpush1.msra.mxu0 0.0
    %701 = vmatprep.mubr.f32.mxu0 0.0
    %702 = vmatmul.mubr.f32.gmra.mrb[0].mxu0 %v565
    %v703 = vpop.f32.mrb[0].mxu0
    %v704 = vadd.f32 %v292, %v703
    %v705 = vpop.f32.mrb[0].mxu0
    %706 = vdwg.mxu0
    %v707 = vadd.f32 %v564, %v634
    %v708 = vxor.u32 %v707, 2147483648
    %v709 = vmul.f32 %v708, 1.442695
    %v710 = vpow.pop %v709
    %v711 = vadd.f32 %v710, 1.0
    %v712 = vrcp.pop %v711
    %v713 = vmul.f32 1.0, %v712
    %v714 = vmul.f32 %v713, %v704
    %716 = vrot.lane.b32.xlu0 %v714, 64
    %v717 = vpop.permute.xlu0 %716
    %v719 = vadd.f32 %v564, %v717
    %v720 = vtanh.pop %v719
    %v721 = vsub.f32 1.0, %v713
    %723 = vrot.lane.b32.xlu0 %v720, 96
    %v724 = vpop.permute.xlu0 %723
    %v726 = vmul.f32 %v721, %v724
    %v727 = vmul.f32 %v713, %v556
    %v728 = vadd.f32 %v726, %v727
    %730 = vrot.lane.b32.xlu0 %v728, 96
    %v731 = vpop.permute.xlu0 %730
    %s733 = scalar_lea.vmem [#allocation3], 16
    %734 = vst.msk [vmem:[%s733] sm:$0xff] %vm214, %v731
    %s735 = scalar_lea.vmem [#allocation2], 24
    %v736 = vld [vmem:[%s735] sm:$0xff]
    %v737 = vsel %vm214, %v731, 0
    %739 = vmatprep.subr.mxu0 0.0
    %740 = vmatpush1.msra.mxu0 %v204
    %741 = vmatprep.subr.mxu0 0.0
    %742 = vmatpush1.msra.mxu0 %v205
    %743 = vmatprep.subr.mxu0 0.0
    %744 = vmatpush1.msra.mxu0 %v206
    %745 = vmatprep.subr.mxu0 0.0
    %746 = vmatpush1.msra.mxu0 %v207
    %747 = vmatprep.subr.mxu0 0.0
    %748 = vmatpush1.msra.mxu0 0.0
    %749 = vmatprep.subr.mxu0 0.0
    %750 = vmatpush1.msra.mxu0 0.0
    %751 = vmatprep.subr.mxu0 0.0
    %752 = vmatpush1.msra.mxu0 0.0
    %753 = vmatprep.subr.mxu0 0.0
    %754 = vmatpush1.msra.mxu0 0.0
    %755 = vmatprep.subr.mxu0 0.0
    %756 = vmatpush1.msra.mxu0 0.0
    %757 = vmatprep.subr.mxu0 0.0
    %758 = vmatpush1.msra.mxu0 0.0
    %759 = vmatprep.subr.mxu0 0.0
    %760 = vmatpush1.msra.mxu0 0.0
    %761 = vmatprep.subr.mxu0 0.0
    %762 = vmatpush1.msra.mxu0 0.0
    %763 = vmatprep.subr.mxu0 0.0
    %764 = vmatpush1.msra.mxu0 0.0
    %765 = vmatprep.subr.mxu0 0.0
    %766 = vmatpush1.msra.mxu0 0.0
    %767 = vmatprep.subr.mxu0 0.0
    %768 = vmatpush1.msra.mxu0 0.0
    %769 = vmatprep.subr.mxu0 0.0
    %770 = vmatpush1.msra.mxu0 0.0
    %771 = vmatprep.subr.mxu0 0.0
    %772 = vmatpush1.msra.mxu0 0.0
    %773 = vmatprep.subr.mxu0 0.0
    %774 = vmatpush1.msra.mxu0 0.0
    %775 = vmatprep.subr.mxu0 0.0
    %776 = vmatpush1.msra.mxu0 0.0
    %777 = vmatprep.subr.mxu0 0.0
    %778 = vmatpush1.msra.mxu0 0.0
    %779 = vmatprep.subr.mxu0 0.0
    %780 = vmatpush1.msra.mxu0 0.0
    %781 = vmatprep.subr.mxu0 0.0
    %782 = vmatpush1.msra.mxu0 0.0
    %783 = vmatprep.subr.mxu0 0.0
    %784 = vmatpush1.msra.mxu0 0.0
    %785 = vmatprep.subr.mxu0 0.0
    %786 = vmatpush1.msra.mxu0 0.0
    %787 = vmatprep.subr.mxu0 0.0
    %788 = vmatpush1.msra.mxu0 0.0
    %789 = vmatprep.subr.mxu0 0.0
    %790 = vmatpush1.msra.mxu0 0.0
    %791 = vmatprep.subr.mxu0 0.0
    %792 = vmatpush1.msra.mxu0 0.0
    %793 = vmatprep.subr.mxu0 0.0
    %794 = vmatpush1.msra.mxu0 0.0
    %795 = vmatprep.subr.mxu0 0.0
    %796 = vmatpush1.msra.mxu0 0.0
    %797 = vmatprep.subr.mxu0 0.0
    %798 = vmatpush1.msra.mxu0 0.0
    %799 = vmatprep.subr.mxu0 0.0
    %800 = vmatpush1.msra.mxu0 0.0
    %801 = vmatprep.subr.mxu0 0.0
    %802 = vmatpush1.msra.mxu0 0.0
    %803 = vmatprep.mubr.f32.mxu0 0.0
    %804 = vmatmul.mubr.f32.gmra.mrb[0].mxu0 %v737
    %v805 = vpop.f32.mrb[0].mxu0
    %v806 = vadd.f32 0.0, %v805
    %v807 = vpop.f32.mrb[0].mxu0
    %808 = vdwg.mxu0
    %809 = vmatprep.subr.mxu0 0.0
    %810 = vmatpush1.msra.mxu0 %v208
    %811 = vmatprep.subr.mxu0 0.0
    %812 = vmatpush1.msra.mxu0 %v209
    %813 = vmatprep.subr.mxu0 0.0
    %814 = vmatpush1.msra.mxu0 %v210
    %815 = vmatprep.subr.mxu0 0.0
    %816 = vmatpush1.msra.mxu0 %v211
    %817 = vmatprep.subr.mxu0 0.0
    %818 = vmatpush1.msra.mxu0 0.0
    %819 = vmatprep.subr.mxu0 0.0
    %820 = vmatpush1.msra.mxu0 0.0
    %821 = vmatprep.subr.mxu0 0.0
    %822 = vmatpush1.msra.mxu0 0.0
    %823 = vmatprep.subr.mxu0 0.0
    %824 = vmatpush1.msra.mxu0 0.0
    %825 = vmatprep.subr.mxu0 0.0
    %826 = vmatpush1.msra.mxu0 0.0
    %827 = vmatprep.subr.mxu0 0.0
    %828 = vmatpush1.msra.mxu0 0.0
    %829 = vmatprep.subr.mxu0 0.0
    %830 = vmatpush1.msra.mxu0 0.0
    %831 = vmatprep.subr.mxu0 0.0
    %832 = vmatpush1.msra.mxu0 0.0
    %833 = vmatprep.subr.mxu0 0.0
    %834 = vmatpush1.msra.mxu0 0.0
    %835 = vmatprep.subr.mxu0 0.0
    %836 = vmatpush1.msra.mxu0 0.0
    %837 = vmatprep.subr.mxu0 0.0
    %838 = vmatpush1.msra.mxu0 0.0
    %839 = vmatprep.subr.mxu0 0.0
    %840 = vmatpush1.msra.mxu0 0.0
    %841 = vmatprep.subr.mxu0 0.0
    %842 = vmatpush1.msra.mxu0 0.0
    %843 = vmatprep.subr.mxu0 0.0
    %844 = vmatpush1.msra.mxu0 0.0
    %845 = vmatprep.subr.mxu0 0.0
    %846 = vmatpush1.msra.mxu0 0.0
    %847 = vmatprep.subr.mxu0 0.0
    %848 = vmatpush1.msra.mxu0 0.0
    %849 = vmatprep.subr.mxu0 0.0
    %850 = vmatpush1.msra.mxu0 0.0
    %851 = vmatprep.subr.mxu0 0.0
    %852 = vmatpush1.msra.mxu0 0.0
    %853 = vmatprep.subr.mxu0 0.0
    %854 = vmatpush1.msra.mxu0 0.0
    %855 = vmatprep.subr.mxu0 0.0
    %856 = vmatpush1.msra.mxu0 0.0
    %857 = vmatprep.subr.mxu0 0.0
    %858 = vmatpush1.msra.mxu0 0.0
    %859 = vmatprep.subr.mxu0 0.0
    %860 = vmatpush1.msra.mxu0 0.0
    %861 = vmatprep.subr.mxu0 0.0
    %862 = vmatpush1.msra.mxu0 0.0
    %863 = vmatprep.subr.mxu0 0.0
    %864 = vmatpush1.msra.mxu0 0.0
    %865 = vmatprep.subr.mxu0 0.0
    %866 = vmatpush1.msra.mxu0 0.0
    %867 = vmatprep.subr.mxu0 0.0
    %868 = vmatpush1.msra.mxu0 0.0
    %869 = vmatprep.subr.mxu0 0.0
    %870 = vmatpush1.msra.mxu0 0.0
    %871 = vmatprep.subr.mxu0 0.0
    %872 = vmatpush1.msra.mxu0 0.0
    %873 = vmatprep.mubr.f32.mxu0 0.0
    %874 = vmatmul.mubr.f32.gmra.mrb[0].mxu0 %v737
    %v875 = vpop.f32.mrb[0].mxu0
    %v876 = vadd.f32 %v292, %v875
    %v877 = vpop.f32.mrb[0].mxu0
    %878 = vdwg.mxu0
    %v879 = vadd.f32 %v736, %v806
    %v880 = vxor.u32 %v879, 2147483648
    %v881 = vmul.f32 %v880, 1.442695
    %v882 = vpow.pop %v881
    %v883 = vadd.f32 %v882, 1.0
    %v884 = vrcp.pop %v883
    %v885 = vmul.f32 1.0, %v884
    %v886 = vmul.f32 %v885, %v876
    %888 = vrot.lane.b32.xlu0 %v886, 64
    %v889 = vpop.permute.xlu0 %888
    %v891 = vadd.f32 %v736, %v889
    %v892 = vtanh.pop %v891
    %v893 = vsub.f32 1.0, %v885
    %895 = vrot.lane.b32.xlu0 %v892, 96
    %v896 = vpop.permute.xlu0 %895
    %v898 = vmul.f32 %v893, %v896
    %v899 = vmul.f32 %v885, %v728
    %v900 = vadd.f32 %v898, %v899
    %902 = vrot.lane.b32.xlu0 %v900, 96
    %v903 = vpop.permute.xlu0 %902
    %s905 = scalar_lea.vmem [#allocation3], 24
    %906 = vst.msk [vmem:[%s905] sm:$0xff] %vm214, %v903
    %s907 = scalar_lea.vmem [#allocation2], 32
    %v908 = vld [vmem:[%s907] sm:$0xff]
    %v909 = vsel %vm214, %v903, 0
    %911 = vmatprep.subr.mxu0 0.0
    %912 = vmatpush1.msra.mxu0 %v204
    %913 = vmatprep.subr.mxu0 0.0
    %914 = vmatpush1.msra.mxu0 %v205
    %915 = vmatprep.subr.mxu0 0.0
    %916 = vmatpush1.msra.mxu0 %v206
    %917 = vmatprep.subr.mxu0 0.0
    %918 = vmatpush1.msra.mxu0 %v207
    %919 = vmatprep.subr.mxu0 0.0
    %920 = vmatpush1.msra.mxu0 0.0
    %921 = vmatprep.subr.mxu0 0.0
    %922 = vmatpush1.msra.mxu0 0.0
    %923 = vmatprep.subr.mxu0 0.0
    %924 = vmatpush1.msra.mxu0 0.0
    %925 = vmatprep.subr.mxu0 0.0
    %926 = vmatpush1.msra.mxu0 0.0
    %927 = vmatprep.subr.mxu0 0.0
    %928 = vmatpush1.msra.mxu0 0.0
    %929 = vmatprep.subr.mxu0 0.0
    %930 = vmatpush1.msra.mxu0 0.0
    %931 = vmatprep.subr.mxu0 0.0
    %932 = vmatpush1.msra.mxu0 0.0
    %933 = vmatprep.subr.mxu0 0.0
    %934 = vmatpush1.msra.mxu0 0.0
    %935 = vmatprep.subr.mxu0 0.0
    %936 = vmatpush1.msra.mxu0 0.0
    %937 = vmatprep.subr.mxu0 0.0
    %938 = vmatpush1.msra.mxu0 0.0
    %939 = vmatprep.subr.mxu0 0.0
    %940 = vmatpush1.msra.mxu0 0.0
    %941 = vmatprep.subr.mxu0 0.0
    %942 = vmatpush1.msra.mxu0 0.0
    %943 = vmatprep.subr.mxu0 0.0
    %944 = vmatpush1.msra.mxu0 0.0
    %945 = vmatprep.subr.mxu0 0.0
    %946 = vmatpush1.msra.mxu0 0.0
    %947 = vmatprep.subr.mxu0 0.0
    %948 = vmatpush1.msra.mxu0 0.0
    %949 = vmatprep.subr.mxu0 0.0
    %950 = vmatpush1.msra.mxu0 0.0
    %951 = vmatprep.subr.mxu0 0.0
    %952 = vmatpush1.msra.mxu0 0.0
    %953 = vmatprep.subr.mxu0 0.0
    %954 = vmatpush1.msra.mxu0 0.0
    %955 = vmatprep.subr.mxu0 0.0
    %956 = vmatpush1.msra.mxu0 0.0
    %957 = vmatprep.subr.mxu0 0.0
    %958 = vmatpush1.msra.mxu0 0.0
    %959 = vmatprep.subr.mxu0 0.0
    %960 = vmatpush1.msra.mxu0 0.0
    %961 = vmatprep.subr.mxu0 0.0
    %962 = vmatpush1.msra.mxu0 0.0
    %963 = vmatprep.subr.mxu0 0.0
    %964 = vmatpush1.msra.mxu0 0.0
    %965 = vmatprep.subr.mxu0 0.0
    %966 = vmatpush1.msra.mxu0 0.0
    %967 = vmatprep.subr.mxu0 0.0
    %968 = vmatpush1.msra.mxu0 0.0
    %969 = vmatprep.subr.mxu0 0.0
    %970 = vmatpush1.msra.mxu0 0.0
    %971 = vmatprep.subr.mxu0 0.0
    %972 = vmatpush1.msra.mxu0 0.0
    %973 = vmatprep.subr.mxu0 0.0
    %974 = vmatpush1.msra.mxu0 0.0
    %975 = vmatprep.mubr.f32.mxu0 0.0
    %976 = vmatmul.mubr.f32.gmra.mrb[0].mxu0 %v909
    %v977 = vpop.f32.mrb[0].mxu0
    %v978 = vadd.f32 0.0, %v977
    %v979 = vpop.f32.mrb[0].mxu0
    %980 = vdwg.mxu0
    %981 = vmatprep.subr.mxu0 0.0
    %982 = vmatpush1.msra.mxu0 %v208
    %983 = vmatprep.subr.mxu0 0.0
    %984 = vmatpush1.msra.mxu0 %v209
    %985 = vmatprep.subr.mxu0 0.0
    %986 = vmatpush1.msra.mxu0 %v210
    %987 = vmatprep.subr.mxu0 0.0
    %988 = vmatpush1.msra.mxu0 %v211
    %989 = vmatprep.subr.mxu0 0.0
    %990 = vmatpush1.msra.mxu0 0.0
    %991 = vmatprep.subr.mxu0 0.0
    %992 = vmatpush1.msra.mxu0 0.0
    %993 = vmatprep.subr.mxu0 0.0
    %994 = vmatpush1.msra.mxu0 0.0
    %995 = vmatprep.subr.mxu0 0.0
    %996 = vmatpush1.msra.mxu0 0.0
    %997 = vmatprep.subr.mxu0 0.0
    %998 = vmatpush1.msra.mxu0 0.0
    %999 = vmatprep.subr.mxu0 0.0
    %1000 = vmatpush1.msra.mxu0 0.0
    %1001 = vmatprep.subr.mxu0 0.0
    %1002 = vmatpush1.msra.mxu0 0.0
    %1003 = vmatprep.subr.mxu0 0.0
    %1004 = vmatpush1.msra.mxu0 0.0
    %1005 = vmatprep.subr.mxu0 0.0
    %1006 = vmatpush1.msra.mxu0 0.0
    %1007 = vmatprep.subr.mxu0 0.0
    %1008 = vmatpush1.msra.mxu0 0.0
    %1009 = vmatprep.subr.mxu0 0.0
    %1010 = vmatpush1.msra.mxu0 0.0
    %1011 = vmatprep.subr.mxu0 0.0
    %1012 = vmatpush1.msra.mxu0 0.0
    %1013 = vmatprep.subr.mxu0 0.0
    %1014 = vmatpush1.msra.mxu0 0.0
    %1015 = vmatprep.subr.mxu0 0.0
    %1016 = vmatpush1.msra.mxu0 0.0
    %1017 = vmatprep.subr.mxu0 0.0
    %1018 = vmatpush1.msra.mxu0 0.0
    %1019 = vmatprep.subr.mxu0 0.0
    %1020 = vmatpush1.msra.mxu0 0.0
    %1021 = vmatprep.subr.mxu0 0.0
    %1022 = vmatpush1.msra.mxu0 0.0
    %1023 = vmatprep.subr.mxu0 0.0
    %1024 = vmatpush1.msra.mxu0 0.0
    %1025 = vmatprep.subr.mxu0 0.0
    %1026 = vmatpush1.msra.mxu0 0.0
    %1027 = vmatprep.subr.mxu0 0.0
    %1028 = vmatpush1.msra.mxu0 0.0
    %1029 = vmatprep.subr.mxu0 0.0
    %1030 = vmatpush1.msra.mxu0 0.0
    %1031 = vmatprep.subr.mxu0 0.0
    %1032 = vmatpush1.msra.mxu0 0.0
    %1033 = vmatprep.subr.mxu0 0.0
    %1034 = vmatpush1.msra.mxu0 0.0
    %1035 = vmatprep.subr.mxu0 0.0
    %1036 = vmatpush1.msra.mxu0 0.0
    %1037 = vmatprep.subr.mxu0 0.0
    %1038 = vmatpush1.msra.mxu0 0.0
    %1039 = vmatprep.subr.mxu0 0.0
    %1040 = vmatpush1.msra.mxu0 0.0
    %1041 = vmatprep.subr.mxu0 0.0
    %1042 = vmatpush1.msra.mxu0 0.0
    %1043 = vmatprep.subr.mxu0 0.0
    %1044 = vmatpush1.msra.mxu0 0.0
    %1045 = vmatprep.mubr.f32.mxu0 0.0
    %1046 = vmatmul.mubr.f32.gmra.mrb[0].mxu0 %v909
    %v1047 = vpop.f32.mrb[0].mxu0
    %v1048 = vadd.f32 %v292, %v1047
    %v1049 = vpop.f32.mrb[0].mxu0
    %1050 = vdwg.mxu0
    %v1051 = vadd.f32 %v908, %v978
    %v1052 = vxor.u32 %v1051, 2147483648
    %v1053 = vmul.f32 %v1052, 1.442695
    %v1054 = vpow.pop %v1053
    %v1055 = vadd.f32 %v1054, 1.0
    %v1056 = vrcp.pop %v1055
    %v1057 = vmul.f32 1.0, %v1056
    %v1058 = vmul.f32 %v1057, %v1048
    %1060 = vrot.lane.b32.xlu0 %v1058, 64
    %v1061 = vpop.permute.xlu0 %1060
    %v1063 = vadd.f32 %v908, %v1061
    %v1064 = vtanh.pop %v1063
    %v1065 = vsub.f32 1.0, %v1057
    %1067 = vrot.lane.b32.xlu0 %v1064, 96
    %v1068 = vpop.permute.xlu0 %1067
    %v1070 = vmul.f32 %v1065, %v1068
    %v1071 = vmul.f32 %v1057, %v900
    %v1072 = vadd.f32 %v1070, %v1071
    %1074 = vrot.lane.b32.xlu0 %v1072, 96
    %v1075 = vpop.permute.xlu0 %1074
    %s1077 = scalar_lea.vmem [#allocation3], 32
    %1078 = vst.msk [vmem:[%s1077] sm:$0xff] %vm214, %v1075
    %s1079 = scalar_lea.vmem [#allocation2], 40
    %v1080 = vld [vmem:[%s1079] sm:$0xff]
    %v1081 = vsel %vm214, %v1075, 0
    %1083 = vmatprep.subr.mxu0 0.0
    %1084 = vmatpush1.msra.mxu0 %v204
    %1085 = vmatprep.subr.mxu0 0.0
    %1086 = vmatpush1.msra.mxu0 %v205
    %1087 = vmatprep.subr.mxu0 0.0
    %1088 = vmatpush1.msra.mxu0 %v206
    %1089 = vmatprep.subr.mxu0 0.0
    %1090 = vmatpush1.msra.mxu0 %v207
    %1091 = vmatprep.subr.mxu0 0.0
    %1092 = vmatpush1.msra.mxu0 0.0
    %1093 = vmatprep.subr.mxu0 0.0
    %1094 = vmatpush1.msra.mxu0 0.0
    %1095 = vmatprep.subr.mxu0 0.0
    %1096 = vmatpush1.msra.mxu0 0.0
    %1097 = vmatprep.subr.mxu0 0.0
    %1098 = vmatpush1.msra.mxu0 0.0
    %1099 = vmatprep.subr.mxu0 0.0
    %1100 = vmatpush1.msra.mxu0 0.0
    %1101 = vmatprep.subr.mxu0 0.0
    %1102 = vmatpush1.msra.mxu0 0.0
    %1103 = vmatprep.subr.mxu0 0.0
    %1104 = vmatpush1.msra.mxu0 0.0
    %1105 = vmatprep.subr.mxu0 0.0
    %1106 = vmatpush1.msra.mxu0 0.0
    %1107 = vmatprep.subr.mxu0 0.0
    %1108 = vmatpush1.msra.mxu0 0.0
    %1109 = vmatprep.subr.mxu0 0.0
    %1110 = vmatpush1.msra.mxu0 0.0
    %1111 = vmatprep.subr.mxu0 0.0
    %1112 = vmatpush1.msra.mxu0 0.0
    %1113 = vmatprep.subr.mxu0 0.0
    %1114 = vmatpush1.msra.mxu0 0.0
    %1115 = vmatprep.subr.mxu0 0.0
    %1116 = vmatpush1.msra.mxu0 0.0
    %1117 = vmatprep.subr.mxu0 0.0
    %1118 = vmatpush1.msra.mxu0 0.0
    %1119 = vmatprep.subr.mxu0 0.0
    %1120 = vmatpush1.msra.mxu0 0.0
    %1121 = vmatprep.subr.mxu0 0.0
    %1122 = vmatpush1.msra.mxu0 0.0
    %1123 = vmatprep.subr.mxu0 0.0
    %1124 = vmatpush1.msra.mxu0 0.0
    %1125 = vmatprep.subr.mxu0 0.0
    %1126 = vmatpush1.msra.mxu0 0.0
    %1127 = vmatprep.subr.mxu0 0.0
    %1128 = vmatpush1.msra.mxu0 0.0
    %1129 = vmatprep.subr.mxu0 0.0
    %1130 = vmatpush1.msra.mxu0 0.0
    %1131 = vmatprep.subr.mxu0 0.0
    %1132 = vmatpush1.msra.mxu0 0.0
    %1133 = vmatprep.subr.mxu0 0.0
    %1134 = vmatpush1.msra.mxu0 0.0
    %1135 = vmatprep.subr.mxu0 0.0
    %1136 = vmatpush1.msra.mxu0 0.0
    %1137 = vmatprep.subr.mxu0 0.0
    %1138 = vmatpush1.msra.mxu0 0.0
    %1139 = vmatprep.subr.mxu0 0.0
    %1140 = vmatpush1.msra.mxu0 0.0
    %1141 = vmatprep.subr.mxu0 0.0
    %1142 = vmatpush1.msra.mxu0 0.0
    %1143 = vmatprep.subr.mxu0 0.0
    %1144 = vmatpush1.msra.mxu0 0.0
    %1145 = vmatprep.subr.mxu0 0.0
    %1146 = vmatpush1.msra.mxu0 0.0
    %1147 = vmatprep.mubr.f32.mxu0 0.0
    %1148 = vmatmul.mubr.f32.gmra.mrb[0].mxu0 %v1081
    %v1149 = vpop.f32.mrb[0].mxu0
    %v1150 = vadd.f32 0.0, %v1149
    %v1151 = vpop.f32.mrb[0].mxu0
    %1152 = vdwg.mxu0
    %1153 = vmatprep.subr.mxu0 0.0
    %1154 = vmatpush1.msra.mxu0 %v208
    %1155 = vmatprep.subr.mxu0 0.0
    %1156 = vmatpush1.msra.mxu0 %v209
    %1157 = vmatprep.subr.mxu0 0.0
    %1158 = vmatpush1.msra.mxu0 %v210
    %1159 = vmatprep.subr.mxu0 0.0
    %1160 = vmatpush1.msra.mxu0 %v211
    %1161 = vmatprep.subr.mxu0 0.0
    %1162 = vmatpush1.msra.mxu0 0.0
    %1163 = vmatprep.subr.mxu0 0.0
    %1164 = vmatpush1.msra.mxu0 0.0
    %1165 = vmatprep.subr.mxu0 0.0
    %1166 = vmatpush1.msra.mxu0 0.0
    %1167 = vmatprep.subr.mxu0 0.0
    %1168 = vmatpush1.msra.mxu0 0.0
    %1169 = vmatprep.subr.mxu0 0.0
    %1170 = vmatpush1.msra.mxu0 0.0
    %1171 = vmatprep.subr.mxu0 0.0
    %1172 = vmatpush1.msra.mxu0 0.0
    %1173 = vmatprep.subr.mxu0 0.0
    %1174 = vmatpush1.msra.mxu0 0.0
    %1175 = vmatprep.subr.mxu0 0.0
    %1176 = vmatpush1.msra.mxu0 0.0
    %1177 = vmatprep.subr.mxu0 0.0
    %1178 = vmatpush1.msra.mxu0 0.0
    %1179 = vmatprep.subr.mxu0 0.0
    %1180 = vmatpush1.msra.mxu0 0.0
    %1181 = vmatprep.subr.mxu0 0.0
    %1182 = vmatpush1.msra.mxu0 0.0
    %1183 = vmatprep.subr.mxu0 0.0
    %1184 = vmatpush1.msra.mxu0 0.0
    %1185 = vmatprep.subr.mxu0 0.0
    %1186 = vmatpush1.msra.mxu0 0.0
    %1187 = vmatprep.subr.mxu0 0.0
    %1188 = vmatpush1.msra.mxu0 0.0
    %1189 = vmatprep.subr.mxu0 0.0
    %1190 = vmatpush1.msra.mxu0 0.0
    %1191 = vmatprep.subr.mxu0 0.0
    %1192 = vmatpush1.msra.mxu0 0.0
    %1193 = vmatprep.subr.mxu0 0.0
    %1194 = vmatpush1.msra.mxu0 0.0
    %1195 = vmatprep.subr.mxu0 0.0
    %1196 = vmatpush1.msra.mxu0 0.0
    %1197 = vmatprep.subr.mxu0 0.0
    %1198 = vmatpush1.msra.mxu0 0.0
    %1199 = vmatprep.subr.mxu0 0.0
    %1200 = vmatpush1.msra.mxu0 0.0
    %1201 = vmatprep.subr.mxu0 0.0
    %1202 = vmatpush1.msra.mxu0 0.0
    %1203 = vmatprep.subr.mxu0 0.0
    %1204 = vmatpush1.msra.mxu0 0.0
    %1205 = vmatprep.subr.mxu0 0.0
    %1206 = vmatpush1.msra.mxu0 0.0
    %1207 = vmatprep.subr.mxu0 0.0
    %1208 = vmatpush1.msra.mxu0 0.0
    %1209 = vmatprep.subr.mxu0 0.0
    %1210 = vmatpush1.msra.mxu0 0.0
    %1211 = vmatprep.subr.mxu0 0.0
    %1212 = vmatpush1.msra.mxu0 0.0
    %1213 = vmatprep.subr.mxu0 0.0
    %1214 = vmatpush1.msra.mxu0 0.0
    %1215 = vmatprep.subr.mxu0 0.0
    %1216 = vmatpush1.msra.mxu0 0.0
    %1217 = vmatprep.mubr.f32.mxu0 0.0
    %1218 = vmatmul.mubr.f32.gmra.mrb[0].mxu0 %v1081
    %v1219 = vpop.f32.mrb[0].mxu0
    %v1220 = vadd.f32 %v292, %v1219
    %v1221 = vpop.f32.mrb[0].mxu0
    %1222 = vdwg.mxu0
    %v1223 = vadd.f32 %v1080, %v1150
    %v1224 = vxor.u32 %v1223, 2147483648
    %v1225 = vmul.f32 %v1224, 1.442695
    %v1226 = vpow.pop %v1225
    %v1227 = vadd.f32 %v1226, 1.0
    %v1228 = vrcp.pop %v1227
    %v1229 = vmul.f32 1.0, %v1228
    %v1230 = vmul.f32 %v1229, %v1220
    %1232 = vrot.lane.b32.xlu0 %v1230, 64
    %v1233 = vpop.permute.xlu0 %1232
    %v1235 = vadd.f32 %v1080, %v1233
    %v1236 = vtanh.pop %v1235
    %v1237 = vsub.f32 1.0, %v1229
    %1239 = vrot.lane.b32.xlu0 %v1236, 96
    %v1240 = vpop.permute.xlu0 %1239
    %v1242 = vmul.f32 %v1237, %v1240
    %v1243 = vmul.f32 %v1229, %v1072
    %v1244 = vadd.f32 %v1242, %v1243
    %1246 = vrot.lane.b32.xlu0 %v1244, 96
    %v1247 = vpop.permute.xlu0 %1246
    %s1249 = scalar_lea.vmem [#allocation3], 40
    %1250 = vst.msk [vmem:[%s1249] sm:$0xff] %vm214, %v1247
    %s1251 = scalar_lea.vmem [#allocation2], 48
    %v1252 = vld [vmem:[%s1251] sm:$0xff]
    %v1253 = vsel %vm214, %v1247, 0
    %1255 = vmatprep.subr.mxu0 0.0
    %1256 = vmatpush1.msra.mxu0 %v204
    %1257 = vmatprep.subr.mxu0 0.0
    %1258 = vmatpush1.msra.mxu0 %v205
    %1259 = vmatprep.subr.mxu0 0.0
    %1260 = vmatpush1.msra.mxu0 %v206
    %1261 = vmatprep.subr.mxu0 0.0
    %1262 = vmatpush1.msra.mxu0 %v207
    %1263 = vmatprep.subr.mxu0 0.0
    %1264 = vmatpush1.msra.mxu0 0.0
    %1265 = vmatprep.subr.mxu0 0.0
    %1266 = vmatpush1.msra.mxu0 0.0
    %1267 = vmatprep.subr.mxu0 0.0
    %1268 = vmatpush1.msra.mxu0 0.0
    %1269 = vmatprep.subr.mxu0 0.0
    %1270 = vmatpush1.msra.mxu0 0.0
    %1271 = vmatprep.subr.mxu0 0.0
    %1272 = vmatpush1.msra.mxu0 0.0
    %1273 = vmatprep.subr.mxu0 0.0
    %1274 = vmatpush1.msra.mxu0 0.0
    %1275 = vmatprep.subr.mxu0 0.0
    %1276 = vmatpush1.msra.mxu0 0.0
    %1277 = vmatprep.subr.mxu0 0.0
    %1278 = vmatpush1.msra.mxu0 0.0
    %1279 = vmatprep.subr.mxu0 0.0
    %1280 = vmatpush1.msra.mxu0 0.0
    %1281 = vmatprep.subr.mxu0 0.0
    %1282 = vmatpush1.msra.mxu0 0.0
    %1283 = vmatprep.subr.mxu0 0.0
    %1284 = vmatpush1.msra.mxu0 0.0
    %1285 = vmatprep.subr.mxu0 0.0
    %1286 = vmatpush1.msra.mxu0 0.0
    %1287 = vmatprep.subr.mxu0 0.0
    %1288 = vmatpush1.msra.mxu0 0.0
    %1289 = vmatprep.subr.mxu0 0.0
    %1290 = vmatpush1.msra.mxu0 0.0
    %1291 = vmatprep.subr.mxu0 0.0
    %1292 = vmatpush1.msra.mxu0 0.0
    %1293 = vmatprep.subr.mxu0 0.0
    %1294 = vmatpush1.msra.mxu0 0.0
    %1295 = vmatprep.subr.mxu0 0.0
    %1296 = vmatpush1.msra.mxu0 0.0
    %1297 = vmatprep.subr.mxu0 0.0
    %1298 = vmatpush1.msra.mxu0 0.0
    %1299 = vmatprep.subr.mxu0 0.0
    %1300 = vmatpush1.msra.mxu0 0.0
    %1301 = vmatprep.subr.mxu0 0.0
    %1302 = vmatpush1.msra.mxu0 0.0
    %1303 = vmatprep.subr.mxu0 0.0
    %1304 = vmatpush1.msra.mxu0 0.0
    %1305 = vmatprep.subr.mxu0 0.0
    %1306 = vmatpush1.msra.mxu0 0.0
    %1307 = vmatprep.subr.mxu0 0.0
    %1308 = vmatpush1.msra.mxu0 0.0
    %1309 = vmatprep.subr.mxu0 0.0
    %1310 = vmatpush1.msra.mxu0 0.0
    %1311 = vmatprep.subr.mxu0 0.0
    %1312 = vmatpush1.msra.mxu0 0.0
    %1313 = vmatprep.subr.mxu0 0.0
    %1314 = vmatpush1.msra.mxu0 0.0
    %1315 = vmatprep.subr.mxu0 0.0
    %1316 = vmatpush1.msra.mxu0 0.0
    %1317 = vmatprep.subr.mxu0 0.0
    %1318 = vmatpush1.msra.mxu0 0.0
    %1319 = vmatprep.mubr.f32.mxu0 0.0
    %1320 = vmatmul.mubr.f32.gmra.mrb[0].mxu0 %v1253
    %v1321 = vpop.f32.mrb[0].mxu0
    %v1322 = vadd.f32 0.0, %v1321
    %v1323 = vpop.f32.mrb[0].mxu0
    %1324 = vdwg.mxu0
    %1325 = vmatprep.subr.mxu0 0.0
    %1326 = vmatpush1.msra.mxu0 %v208
    %1327 = vmatprep.subr.mxu0 0.0
    %1328 = vmatpush1.msra.mxu0 %v209
    %1329 = vmatprep.subr.mxu0 0.0
    %1330 = vmatpush1.msra.mxu0 %v210
    %1331 = vmatprep.subr.mxu0 0.0
    %1332 = vmatpush1.msra.mxu0 %v211
    %1333 = vmatprep.subr.mxu0 0.0
    %1334 = vmatpush1.msra.mxu0 0.0
    %1335 = vmatprep.subr.mxu0 0.0
    %1336 = vmatpush1.msra.mxu0 0.0
    %1337 = vmatprep.subr.mxu0 0.0
    %1338 = vmatpush1.msra.mxu0 0.0
    %1339 = vmatprep.subr.mxu0 0.0
    %1340 = vmatpush1.msra.mxu0 0.0
    %1341 = vmatprep.subr.mxu0 0.0
    %1342 = vmatpush1.msra.mxu0 0.0
    %1343 = vmatprep.subr.mxu0 0.0
    %1344 = vmatpush1.msra.mxu0 0.0
    %1345 = vmatprep.subr.mxu0 0.0
    %1346 = vmatpush1.msra.mxu0 0.0
    %1347 = vmatprep.subr.mxu0 0.0
    %1348 = vmatpush1.msra.mxu0 0.0
    %1349 = vmatprep.subr.mxu0 0.0
    %1350 = vmatpush1.msra.mxu0 0.0
    %1351 = vmatprep.subr.mxu0 0.0
    %1352 = vmatpush1.msra.mxu0 0.0
    %1353 = vmatprep.subr.mxu0 0.0
    %1354 = vmatpush1.msra.mxu0 0.0
    %1355 = vmatprep.subr.mxu0 0.0
    %1356 = vmatpush1.msra.mxu0 0.0
    %1357 = vmatprep.subr.mxu0 0.0
    %1358 = vmatpush1.msra.mxu0 0.0
    %1359 = vmatprep.subr.mxu0 0.0
    %1360 = vmatpush1.msra.mxu0 0.0
    %1361 = vmatprep.subr.mxu0 0.0
    %1362 = vmatpush1.msra.mxu0 0.0
    %1363 = vmatprep.subr.mxu0 0.0
    %1364 = vmatpush1.msra.mxu0 0.0
    %1365 = vmatprep.subr.mxu0 0.0
    %1366 = vmatpush1.msra.mxu0 0.0
    %1367 = vmatprep.subr.mxu0 0.0
    %1368 = vmatpush1.msra.mxu0 0.0
    %1369 = vmatprep.subr.mxu0 0.0
    %1370 = vmatpush1.msra.mxu0 0.0
    %1371 = vmatprep.subr.mxu0 0.0
    %1372 = vmatpush1.msra.mxu0 0.0
    %1373 = vmatprep.subr.mxu0 0.0
    %1374 = vmatpush1.msra.mxu0 0.0
    %1375 = vmatprep.subr.mxu0 0.0
    %1376 = vmatpush1.msra.mxu0 0.0
    %1377 = vmatprep.subr.mxu0 0.0
    %1378 = vmatpush1.msra.mxu0 0.0
    %1379 = vmatprep.subr.mxu0 0.0
    %1380 = vmatpush1.msra.mxu0 0.0
    %1381 = vmatprep.subr.mxu0 0.0
    %1382 = vmatpush1.msra.mxu0 0.0
    %1383 = vmatprep.subr.mxu0 0.0
    %1384 = vmatpush1.msra.mxu0 0.0
    %1385 = vmatprep.subr.mxu0 0.0
    %1386 = vmatpush1.msra.mxu0 0.0
    %1387 = vmatprep.subr.mxu0 0.0
    %1388 = vmatpush1.msra.mxu0 0.0
    %1389 = vmatprep.mubr.f32.mxu0 0.0
    %1390 = vmatmul.mubr.f32.gmra.mrb[0].mxu0 %v1253
    %v1391 = vpop.f32.mrb[0].mxu0
    %v1392 = vadd.f32 %v292, %v1391
    %v1393 = vpop.f32.mrb[0].mxu0
    %1394 = vdwg.mxu0
    %v1395 = vadd.f32 %v1252, %v1322
    %v1396 = vxor.u32 %v1395, 2147483648
    %v1397 = vmul.f32 %v1396, 1.442695
    %v1398 = vpow.pop %v1397
    %v1399 = vadd.f32 %v1398, 1.0
    %v1400 = vrcp.pop %v1399
    %v1401 = vmul.f32 1.0, %v1400
    %v1402 = vmul.f32 %v1401, %v1392
    %1404 = vrot.lane.b32.xlu0 %v1402, 64
    %v1405 = vpop.permute.xlu0 %1404
    %v1407 = vadd.f32 %v1252, %v1405
    %v1408 = vtanh.pop %v1407
    %v1409 = vsub.f32 1.0, %v1401
    %1411 = vrot.lane.b32.xlu0 %v1408, 96
    %v1412 = vpop.permute.xlu0 %1411
    %v1414 = vmul.f32 %v1409, %v1412
    %v1415 = vmul.f32 %v1401, %v1244
    %v1416 = vadd.f32 %v1414, %v1415
    %1418 = vrot.lane.b32.xlu0 %v1416, 96
    %v1419 = vpop.permute.xlu0 %1418
    %s1421 = scalar_lea.vmem [#allocation3], 48
    %1422 = vst.msk [vmem:[%s1421] sm:$0xff] %vm214, %v1419
    %s1423 = scalar_lea.vmem [#allocation2], 56
    %v1424 = vld [vmem:[%s1423] sm:$0xff]
    %v1425 = vsel %vm214, %v1419, 0
    %1427 = vmatprep.subr.mxu0 0.0
    %1428 = vmatpush1.msra.mxu0 %v204
    %1429 = vmatprep.subr.mxu0 0.0
    %1430 = vmatpush1.msra.mxu0 %v205
    %1431 = vmatprep.subr.mxu0 0.0
    %1432 = vmatpush1.msra.mxu0 %v206
    %1433 = vmatprep.subr.mxu0 0.0
    %1434 = vmatpush1.msra.mxu0 %v207
    %1435 = vmatprep.subr.mxu0 0.0
    %1436 = vmatpush1.msra.mxu0 0.0
    %1437 = vmatprep.subr.mxu0 0.0
    %1438 = vmatpush1.msra.mxu0 0.0
    %1439 = vmatprep.subr.mxu0 0.0
    %1440 = vmatpush1.msra.mxu0 0.0
    %1441 = vmatprep.subr.mxu0 0.0
    %1442 = vmatpush1.msra.mxu0 0.0
    %1443 = vmatprep.subr.mxu0 0.0
    %1444 = vmatpush1.msra.mxu0 0.0
    %1445 = vmatprep.subr.mxu0 0.0
    %1446 = vmatpush1.msra.mxu0 0.0
    %1447 = vmatprep.subr.mxu0 0.0
    %1448 = vmatpush1.msra.mxu0 0.0
    %1449 = vmatprep.subr.mxu0 0.0
    %1450 = vmatpush1.msra.mxu0 0.0
    %1451 = vmatprep.subr.mxu0 0.0
    %1452 = vmatpush1.msra.mxu0 0.0
    %1453 = vmatprep.subr.mxu0 0.0
    %1454 = vmatpush1.msra.mxu0 0.0
    %1455 = vmatprep.subr.mxu0 0.0
    %1456 = vmatpush1.msra.mxu0 0.0
    %1457 = vmatprep.subr.mxu0 0.0
    %1458 = vmatpush1.msra.mxu0 0.0
    %1459 = vmatprep.subr.mxu0 0.0
    %1460 = vmatpush1.msra.mxu0 0.0
    %1461 = vmatprep.subr.mxu0 0.0
    %1462 = vmatpush1.msra.mxu0 0.0
    %1463 = vmatprep.subr.mxu0 0.0
    %1464 = vmatpush1.msra.mxu0 0.0
    %1465 = vmatprep.subr.mxu0 0.0
    %1466 = vmatpush1.msra.mxu0 0.0
    %1467 = vmatprep.subr.mxu0 0.0
    %1468 = vmatpush1.msra.mxu0 0.0
    %1469 = vmatprep.subr.mxu0 0.0
    %1470 = vmatpush1.msra.mxu0 0.0
    %1471 = vmatprep.subr.mxu0 0.0
    %1472 = vmatpush1.msra.mxu0 0.0
    %1473 = vmatprep.subr.mxu0 0.0
    %1474 = vmatpush1.msra.mxu0 0.0
    %1475 = vmatprep.subr.mxu0 0.0
    %1476 = vmatpush1.msra.mxu0 0.0
    %1477 = vmatprep.subr.mxu0 0.0
    %1478 = vmatpush1.msra.mxu0 0.0
    %1479 = vmatprep.subr.mxu0 0.0
    %1480 = vmatpush1.msra.mxu0 0.0
    %1481 = vmatprep.subr.mxu0 0.0
    %1482 = vmatpush1.msra.mxu0 0.0
    %1483 = vmatprep.subr.mxu0 0.0
    %1484 = vmatpush1.msra.mxu0 0.0
    %1485 = vmatprep.subr.mxu0 0.0
    %1486 = vmatpush1.msra.mxu0 0.0
    %1487 = vmatprep.subr.mxu0 0.0
    %1488 = vmatpush1.msra.mxu0 0.0
    %1489 = vmatprep.subr.mxu0 0.0
    %1490 = vmatpush1.msra.mxu0 0.0
    %1491 = vmatprep.mubr.f32.mxu0 0.0
    %1492 = vmatmul.mubr.f32.gmra.mrb[0].mxu0 %v1425
    %v1493 = vpop.f32.mrb[0].mxu0
    %v1494 = vadd.f32 0.0, %v1493
    %v1495 = vpop.f32.mrb[0].mxu0
    %1496 = vdwg.mxu0
    %1497 = vmatprep.subr.mxu0 0.0
    %1498 = vmatpush1.msra.mxu0 %v208
    %1499 = vmatprep.subr.mxu0 0.0
    %1500 = vmatpush1.msra.mxu0 %v209
    %1501 = vmatprep.subr.mxu0 0.0
    %1502 = vmatpush1.msra.mxu0 %v210
    %1503 = vmatprep.subr.mxu0 0.0
    %1504 = vmatpush1.msra.mxu0 %v211
    %1505 = vmatprep.subr.mxu0 0.0
    %1506 = vmatpush1.msra.mxu0 0.0
    %1507 = vmatprep.subr.mxu0 0.0
    %1508 = vmatpush1.msra.mxu0 0.0
    %1509 = vmatprep.subr.mxu0 0.0
    %1510 = vmatpush1.msra.mxu0 0.0
    %1511 = vmatprep.subr.mxu0 0.0
    %1512 = vmatpush1.msra.mxu0 0.0
    %1513 = vmatprep.subr.mxu0 0.0
    %1514 = vmatpush1.msra.mxu0 0.0
    %1515 = vmatprep.subr.mxu0 0.0
    %1516 = vmatpush1.msra.mxu0 0.0
    %1517 = vmatprep.subr.mxu0 0.0
    %1518 = vmatpush1.msra.mxu0 0.0
    %1519 = vmatprep.subr.mxu0 0.0
    %1520 = vmatpush1.msra.mxu0 0.0
    %1521 = vmatprep.subr.mxu0 0.0
    %1522 = vmatpush1.msra.mxu0 0.0
    %1523 = vmatprep.subr.mxu0 0.0
    %1524 = vmatpush1.msra.mxu0 0.0
    %1525 = vmatprep.subr.mxu0 0.0
    %1526 = vmatpush1.msra.mxu0 0.0
    %1527 = vmatprep.subr.mxu0 0.0
    %1528 = vmatpush1.msra.mxu0 0.0
    %1529 = vmatprep.subr.mxu0 0.0
    %1530 = vmatpush1.msra.mxu0 0.0
    %1531 = vmatprep.subr.mxu0 0.0
    %1532 = vmatpush1.msra.mxu0 0.0
    %1533 = vmatprep.subr.mxu0 0.0
    %1534 = vmatpush1.msra.mxu0 0.0
    %1535 = vmatprep.subr.mxu0 0.0
    %1536 = vmatpush1.msra.mxu0 0.0
    %1537 = vmatprep.subr.mxu0 0.0
    %1538 = vmatpush1.msra.mxu0 0.0
    %1539 = vmatprep.subr.mxu0 0.0
    %1540 = vmatpush1.msra.mxu0 0.0
    %1541 = vmatprep.subr.mxu0 0.0
    %1542 = vmatpush1.msra.mxu0 0.0
    %1543 = vmatprep.subr.mxu0 0.0
    %1544 = vmatpush1.msra.mxu0 0.0
    %1545 = vmatprep.subr.mxu0 0.0
    %1546 = vmatpush1.msra.mxu0 0.0
    %1547 = vmatprep.subr.mxu0 0.0
    %1548 = vmatpush1.msra.mxu0 0.0
    %1549 = vmatprep.subr.mxu0 0.0
    %1550 = vmatpush1.msra.mxu0 0.0
    %1551 = vmatprep.subr.mxu0 0.0
    %1552 = vmatpush1.msra.mxu0 0.0
    %1553 = vmatprep.subr.mxu0 0.0
    %1554 = vmatpush1.msra.mxu0 0.0
    %1555 = vmatprep.subr.mxu0 0.0
    %1556 = vmatpush1.msra.mxu0 0.0
    %1557 = vmatprep.subr.mxu0 0.0
    %1558 = vmatpush1.msra.mxu0 0.0
    %1559 = vmatprep.subr.mxu0 0.0
    %1560 = vmatpush1.msra.mxu0 0.0
    %1561 = vmatprep.mubr.f32.mxu0 0.0
    %1562 = vmatmul.mubr.f32.gmra.mrb[0].mxu0 %v1425
    %v1563 = vpop.f32.mrb[0].mxu0
    %v1564 = vadd.f32 %v292, %v1563
    %v1565 = vpop.f32.mrb[0].mxu0
    %1566 = vdwg.mxu0
    %v1567 = vadd.f32 %v1424, %v1494
    %v1568 = vxor.u32 %v1567, 2147483648
    %v1569 = vmul.f32 %v1568, 1.442695
    %v1570 = vpow.pop %v1569
    %v1571 = vadd.f32 %v1570, 1.0
    %v1572 = vrcp.pop %v1571
    %v1573 = vmul.f32 1.0, %v1572
    %v1574 = vmul.f32 %v1573, %v1564
    %1576 = vrot.lane.b32.xlu0 %v1574, 64
    %v1577 = vpop.permute.xlu0 %1576
    %v1579 = vadd.f32 %v1424, %v1577
    %v1580 = vtanh.pop %v1579
    %v1581 = vsub.f32 1.0, %v1573
    %1583 = vrot.lane.b32.xlu0 %v1580, 96
    %v1584 = vpop.permute.xlu0 %1583
    %v1586 = vmul.f32 %v1581, %v1584
    %v1587 = vmul.f32 %v1573, %v1416
    %v1588 = vadd.f32 %v1586, %v1587
    %1590 = vrot.lane.b32.xlu0 %v1588, 96
    %v1591 = vpop.permute.xlu0 %1590
    %s1593 = scalar_lea.vmem [#allocation3], 56
    %1594 = vst.msk [vmem:[%s1593] sm:$0xff] %vm214, %v1591
    %v1595 = vld [vmem:[#allocation3] sm:$0xff]
    %v1596 = vld [vmem:[#allocation3 + $0x8] sm:$0xff]
    %v1597 = vld [vmem:[#allocation3 + $0x10] sm:$0xff]
    %v1598 = vld [vmem:[#allocation3 + $0x18] sm:$0xff]
    %v1599 = vld [vmem:[#allocation3 + $0x20] sm:$0xff]
    %v1600 = vld [vmem:[#allocation3 + $0x28] sm:$0xff]
    %v1601 = vld [vmem:[#allocation3 + $0x30] sm:$0xff]
    %v1602 = vld [vmem:[#allocation3 + $0x38] sm:$0xff]
    %v1603 = vld [vmem:[%s6] sm:$0xff]
    %v1604 = vld [vmem:[%s6 + $0x8] sm:$0xff]
    %v1605 = vld [vmem:[%s6 + $0x10] sm:$0xff]
    %v1606 = vld [vmem:[%s6 + $0x18] sm:$0xff]
    %v1607 = vld [vmem:[%s7] sm:$0x1]
    %v1609 = vlaneseq
    %v1610 = vshrl.u32 %v1609, 7
    %v1611 = vsub.s32 0, %v1610
    %v1612 = vrot.slane %v1607, %v1611
    %v1615 = vsel %vm214, %v1595, 0
    %v1618 = vsel %vm214, %v1596, 0
    %v1621 = vsel %vm214, %v1597, 0
    %v1624 = vsel %vm214, %v1598, 0
    %v1627 = vsel %vm214, %v1599, 0
    %v1630 = vsel %vm214, %v1600, 0
    %v1633 = vsel %vm214, %v1601, 0
    %v1636 = vsel %vm214, %v1602, 0
    %1638 = vmatprep.subr.mxu0 0.0
    %1639 = vmatpush1.msra.mxu0 %v1603
    %1640 = vmatprep.subr.mxu0 0.0
    %1641 = vmatpush1.msra.mxu0 %v1604
    %1642 = vmatprep.subr.mxu0 0.0
    %1643 = vmatpush1.msra.mxu0 %v1605
    %1644 = vmatprep.subr.mxu0 0.0
    %1645 = vmatpush1.msra.mxu0 %v1606
    %1646 = vmatprep.subr.mxu0 0.0
    %1647 = vmatpush1.msra.mxu0 0.0
    %1648 = vmatprep.subr.mxu0 0.0
    %1649 = vmatpush1.msra.mxu0 0.0
    %1650 = vmatprep.subr.mxu0 0.0
    %1651 = vmatpush1.msra.mxu0 0.0
    %1652 = vmatprep.subr.mxu0 0.0
    %1653 = vmatpush1.msra.mxu0 0.0
    %1654 = vmatprep.subr.mxu0 0.0
    %1655 = vmatpush1.msra.mxu0 0.0
    %1656 = vmatprep.subr.mxu0 0.0
    %1657 = vmatpush1.msra.mxu0 0.0
    %1658 = vmatprep.subr.mxu0 0.0
    %1659 = vmatpush1.msra.mxu0 0.0
    %1660 = vmatprep.subr.mxu0 0.0
    %1661 = vmatpush1.msra.mxu0 0.0
    %1662 = vmatprep.subr.mxu0 0.0
    %1663 = vmatpush1.msra.mxu0 0.0
    %1664 = vmatprep.subr.mxu0 0.0
    %1665 = vmatpush1.msra.mxu0 0.0
    %1666 = vmatprep.subr.mxu0 0.0
    %1667 = vmatpush1.msra.mxu0 0.0
    %1668 = vmatprep.subr.mxu0 0.0
    %1669 = vmatpush1.msra.mxu0 0.0
    %1670 = vmatprep.subr.mxu0 0.0
    %1671 = vmatpush1.msra.mxu0 0.0
    %1672 = vmatprep.subr.mxu0 0.0
    %1673 = vmatpush1.msra.mxu0 0.0
    %1674 = vmatprep.subr.mxu0 0.0
    %1675 = vmatpush1.msra.mxu0 0.0
    %1676 = vmatprep.subr.mxu0 0.0
    %1677 = vmatpush1.msra.mxu0 0.0
    %1678 = vmatprep.subr.mxu0 0.0
    %1679 = vmatpush1.msra.mxu0 0.0
    %1680 = vmatprep.subr.mxu0 0.0
    %1681 = vmatpush1.msra.mxu0 0.0
    %1682 = vmatprep.subr.mxu0 0.0
    %1683 = vmatpush1.msra.mxu0 0.0
    %1684 = vmatprep.subr.mxu0 0.0
    %1685 = vmatpush1.msra.mxu0 0.0
    %1686 = vmatprep.subr.mxu0 0.0
    %1687 = vmatpush1.msra.mxu0 0.0
    %1688 = vmatprep.subr.mxu0 0.0
    %1689 = vmatpush1.msra.mxu0 0.0
    %1690 = vmatprep.subr.mxu0 0.0
    %1691 = vmatpush1.msra.mxu0 0.0
    %1692 = vmatprep.subr.mxu0 0.0
    %1693 = vmatpush1.msra.mxu0 0.0
    %1694 = vmatprep.subr.mxu0 0.0
    %1695 = vmatpush1.msra.mxu0 0.0
    %1696 = vmatprep.subr.mxu0 0.0
    %1697 = vmatpush1.msra.mxu0 0.0
    %1698 = vmatprep.subr.mxu0 0.0
    %1699 = vmatpush1.msra.mxu0 0.0
    %1700 = vmatprep.subr.mxu0 0.0
    %1701 = vmatpush1.msra.mxu0 0.0
    %1702 = vmatprep.mubr.f32.mxu0 0.0
    %1703 = vmatmul.mubr.f32.gmra.mrb[0].mxu0 %v1615
    %v1704 = vpop.f32.mrb[0].mxu0
    %v1705 = vadd.f32 %v1612, %v1704
    %v1706 = vpop.f32.mrb[0].mxu0
    %1707 = vmatprep.mubr.f32.mxu0 0.0
    %1708 = vmatmul.mubr.f32.gmra.mrb[0].mxu0 %v1618
    %v1709 = vpop.f32.mrb[0].mxu0
    %v1710 = vadd.f32 %v1612, %v1709
    %v1711 = vpop.f32.mrb[0].mxu0
    %1712 = vmatprep.mubr.f32.mxu0 0.0
    %1713 = vmatmul.mubr.f32.gmra.mrb[0].mxu0 %v1621
    %v1714 = vpop.f32.mrb[0].mxu0
    %v1715 = vadd.f32 %v1612, %v1714
    %v1716 = vpop.f32.mrb[0].mxu0
    %1717 = vmatprep.mubr.f32.mxu0 0.0
    %1718 = vmatmul.mubr.f32.gmra.mrb[0].mxu0 %v1624
    %v1719 = vpop.f32.mrb[0].mxu0
    %v1720 = vadd.f32 %v1612, %v1719
    %v1721 = vpop.f32.mrb[0].mxu0
    %1722 = vmatprep.mubr.f32.mxu0 0.0
    %1723 = vmatmul.mubr.f32.gmra.mrb[0].mxu0 %v1627
    %v1724 = vpop.f32.mrb[0].mxu0
    %v1725 = vadd.f32 %v1612, %v1724
    %v1726 = vpop.f32.mrb[0].mxu0
    %1727 = vmatprep.mubr.f32.mxu0 0.0
    %1728 = vmatmul.mubr.f32.gmra.mrb[0].mxu0 %v1630
    %v1729 = vpop.f32.mrb[0].mxu0
    %v1730 = vadd.f32 %v1612, %v1729
    %v1731 = vpop.f32.mrb[0].mxu0
    %1732 = vmatprep.mubr.f32.mxu0 0.0
    %1733 = vmatmul.mubr.f32.gmra.mrb[0].mxu0 %v1633
    %v1734 = vpop.f32.mrb[0].mxu0
    %v1735 = vadd.f32 %v1612, %v1734
    %v1736 = vpop.f32.mrb[0].mxu0
    %1737 = vmatprep.mubr.f32.mxu0 0.0
    %1738 = vmatmul.mubr.f32.gmra.mrb[0].mxu0 %v1636
    %v1739 = vpop.f32.mrb[0].mxu0
    %v1740 = vadd.f32 %v1612, %v1739
    %v1741 = vpop.f32.mrb[0].mxu0
    %1742 = vdwg.mxu0
    %1743 = vst [vmem:[#allocation7] sm:$0xff] %v1705
    %1744 = vst [vmem:[#allocation7 + $0x8] sm:$0xff] %v1710
    %1745 = vst [vmem:[#allocation7 + $0x10] sm:$0xff] %v1715
    %1746 = vst [vmem:[#allocation7 + $0x18] sm:$0xff] %v1720
    %1747 = vst [vmem:[#allocation7 + $0x20] sm:$0xff] %v1725
    %1748 = vst [vmem:[#allocation7 + $0x28] sm:$0xff] %v1730
    %1749 = vst [vmem:[#allocation7 + $0x30] sm:$0xff] %v1735
    %1750 = vst [vmem:[#allocation7 + $0x38] sm:$0xff] %v1740
    // Predicated region
    $region38: #{tpu_custom_call.1} parent=1 // pred_check
      _
    $region39: #{tpu_custom_call.1} parent=1 // pred_check_branch
      %1752 = sbr.rel (0) target = $region41
    $region40: #{tpu_custom_call.1} parent=1 // pred_region
      %s1754 = ssub.s32 1024, 1024
      %1755 = vsyncadd [#allocation6], %s1754
      %s1756 = sshll.u32 [#allocation7], 4
      %s1757 = int_to_ptr.vmem [resolvable:$true] %s1756
      %1762 = dma.vmem_to_hbm [thread:$0]  %s1757, 1024, %s8, [#allocation6], 128, 128, 8
    $region41: #{tpu_custom_call.1} parent=1 // pred_fallthru
      _
    // Predicated region
    $region42: #{tpu_custom_call.1} parent=1 // pred_check
      _
    $region43: #{tpu_custom_call.1} parent=1 // pred_check_branch
      %1764 = sbr.rel (0) target = $region45
    $region44: #{tpu_custom_call.1} parent=1 // pred_region
      %1765 = dma.done [#allocation6], 1024
    $region45: #{tpu_custom_call.1} parent=1 // pred_fallthru
      _
    %1766 = vsyncpa [#allocation5], 1
    %1767 = vsyncpa [#allocation6], 1

</llo_original>
